<compile_context>
chip_gen: v5e
topology: v5e:2x2
jax: 0.10.0
libtpu: 0.0.40
codegen_flags: <defaults>
</compile_context>

<pallas_src>
import functools

import jax
import jax.numpy as jnp
from jax.experimental import pallas as pl
from jax.experimental.pallas import tpu as pltpu

VOCAB = 257        # num_embeddings = 257
PAD_TOKEN = 256    # last index treated as pad/mask token


# ----------------------------- fused Pallas kernel ---------------------------


def _im2col(x, K, pad_lo, pad_hi):
    """(TB, L, C) -> (TB*L, K*C) with zero 'same' padding along L, all in VMEM."""
    TB, L, C = x.shape
    parts = []
    if pad_lo:
        parts.append(jnp.zeros((TB, pad_lo, C), x.dtype))
    parts.append(x)
    if pad_hi:
        parts.append(jnp.zeros((TB, pad_hi, C), x.dtype))
    xp = jnp.concatenate(parts, axis=1) if len(parts) > 1 else x
    cols = jnp.concatenate([xp[:, k:k + L, :] for k in range(K)], axis=-1)
    return cols.reshape(TB * L, K * C)


def _fused_forward_kernel(tok_ref, stem_tab_ref, stem_b_ref,
                          w1_ref, b1_ref, w2_ref, b2_ref,
                          head_w_ref, head_b_ref,
                          logits_ref, emb_ref):
    TB = tok_ref.shape[0]
    L = tok_ref.shape[2]
    KV, H = stem_tab_ref.shape
    K_stem = KV // VOCAB
    NB = w1_ref.shape[0]
    K_blk = w1_ref.shape[1] // H

    tok = tok_ref[...].reshape(TB, L)                            # int32

    # ---- embedding folded into stem: one-hot im2col @ (table @ stem_w) ----
    pad_lo = (K_stem - 1) // 2
    pad_hi = K_stem - 1 - pad_lo
    vio = jax.lax.broadcasted_iota(jnp.int32, (TB, L, VOCAB), 2)
    onehot = (tok[:, :, None] == vio).astype(jnp.bfloat16)       # (TB, L, V)
    cols = _im2col(onehot, K_stem, pad_lo, pad_hi)               # (TB*L, K*V)
    h = jnp.dot(cols, stem_tab_ref[...], preferred_element_type=jnp.float32)
    h = jnp.maximum(h + stem_b_ref[...], 0.0).reshape(TB, L, H)  # f32

    # ---- residual conv blocks: one im2col MXU matmul per conv ----
    pad_lo_b = (K_blk - 1) // 2
    pad_hi_b = K_blk - 1 - pad_lo_b

    def conv(x_f32, w_bf16, b_f32):
        c = _im2col(x_f32.astype(jnp.bfloat16), K_blk, pad_lo_b, pad_hi_b)
        y = jnp.dot(c, w_bf16, preferred_element_type=jnp.float32) + b_f32
        return y.reshape(TB, L, H)

    for i in range(NB):                                          # static unroll
        y = jnp.maximum(conv(h, w1_ref[i], b1_ref[i]), 0.0)
        h = jnp.maximum(conv(y, w2_ref[i], b2_ref[i]) + h, 0.0)

    # ---- masked global mean-pool + linear head (mask/divide kept f32) ----
    mask = (tok != PAD_TOKEN).astype(jnp.float32)[:, :, None]    # (TB, L, 1)
    summed = jnp.sum(h * mask, axis=1)                           # (TB, H)
    counts = jnp.maximum(jnp.sum(mask, axis=1), 1.0)             # (TB, 1)
    pooled = summed / counts
    logits = jnp.dot(pooled.astype(jnp.bfloat16), head_w_ref[...],
                     preferred_element_type=jnp.float32) + head_b_ref[...]

    emb_ref[...] = pooled.reshape(TB, 1, H)
    logits_ref[...] = logits.reshape(TB, 1, logits.shape[-1])


# ------------------------------ forward wrapper -------------------------------


def embedding_to_resnet1d_masking(params, tokens, *, batch_tile=1,
                                  vmem_limit_bytes=32 * 1024 * 1024):
    B, L = tokens.shape
    table = params["embedding"].astype(jnp.float32)              # (V, E)
    stem_w = params["stem_w"].astype(jnp.float32)                # (K, E, H)
    K, _, H = stem_w.shape
    O = params["head_w"].shape[1]
    blocks = params["blocks"]
    NB = len(blocks)
    assert NB >= 1 and B % batch_tile == 0

    # Host-side weight prep (tiny, once under jit): fold embedding into stem.
    # Row block k of stem_tab is table @ stem_w[k], matching im2col ordering.
    stem_tab = jnp.concatenate([table @ stem_w[k] for k in range(K)],
                               axis=0).astype(jnp.bfloat16)       # (K*V, H)
    stem_b = params["stem_b"].reshape(1, H).astype(jnp.float32)
    w1 = jnp.stack([b["w1"].reshape(K * H, H) for b in blocks]).astype(jnp.bfloat16)
    b1 = jnp.stack([b["b1"].reshape(1, H) for b in blocks]).astype(jnp.float32)
    w2 = jnp.stack([b["w2"].reshape(K * H, H) for b in blocks]).astype(jnp.bfloat16)
    b2 = jnp.stack([b["b2"].reshape(1, H) for b in blocks]).astype(jnp.float32)
    head_w = params["head_w"].astype(jnp.bfloat16)                # (H, O)
    head_b = params["head_b"].reshape(1, O).astype(jnp.float32)

    # 3-D token/output layout keeps the last two block dims equal to the full
    # array dims (satisfies the (8,128) block constraint) while still letting
    # the leading batch axis be gridded with an arbitrary tile size.
    tok3 = tokens.astype(jnp.int32).reshape(B, 1, L)

    rep2 = lambda b: (0, 0)
    rep3 = lambda b: (0, 0, 0)

    logits3, emb3 = pl.pallas_call(
        _fused_forward_kernel,
        out_shape=(jax.ShapeDtypeStruct((B, 1, O), jnp.float32),
                   jax.ShapeDtypeStruct((B, 1, H), jnp.float32)),
        grid_spec=pltpu.PrefetchScalarGridSpec(
            num_scalar_prefetch=0,
            grid=(B // batch_tile,),
            in_specs=[
                pl.BlockSpec((batch_tile, 1, L), lambda b: (b, 0, 0)),  # tokens
                pl.BlockSpec((K * VOCAB, H), rep2),                     # stem_tab
                pl.BlockSpec((1, H), rep2),                             # stem_b
                pl.BlockSpec((NB, K * H, H), rep3),                     # w1
                pl.BlockSpec((NB, 1, H), rep3),                         # b1
                pl.BlockSpec((NB, K * H, H), rep3),                     # w2
                pl.BlockSpec((NB, 1, H), rep3),                         # b2
                pl.BlockSpec((H, O), rep2),                             # head_w
                pl.BlockSpec((1, O), rep2),                             # head_b
            ],
            out_specs=(
                pl.BlockSpec((batch_tile, 1, O), lambda b: (b, 0, 0)),  # logits
                pl.BlockSpec((batch_tile, 1, H), lambda b: (b, 0, 0)),  # pooled
            ),
        ),
        compiler_params=pltpu.CompilerParams(
            dimension_semantics=("parallel",),      # megacore / v7x dual-TC
            vmem_limit_bytes=vmem_limit_bytes),
    )(tok3, stem_tab, stem_b, w1, b1, w2, b2, head_w, head_b)

    return logits3.reshape(B, O), emb3.reshape(B, H)


# -------------------------- parameters & reference ----------------------------


def init_params(key, embedding_dim, hidden, out_dim, num_blocks, kernel_size):
    n_keys = 5 + 4 * num_blocks    # embedding, stem_w, stem_b, head_w, head_b + 4/block
    keys = iter(jax.random.split(key, n_keys))

    def w(shape, scale=0.05):
        return scale * jax.random.normal(next(keys), shape, dtype=jnp.float32)

    params = {
        "embedding": w((VOCAB, embedding_dim), 0.1),
        "stem_w": w((kernel_size, embedding_dim, hidden)),
        "stem_b": w((hidden,), 0.01),
        "head_w": w((hidden, out_dim)),
        "head_b": w((out_dim,), 0.01),
        "blocks": [],
    }
    for _ in range(num_blocks):
        params["blocks"].append({
            "w1": w((kernel_size, hidden, hidden)),
            "b1": w((hidden,), 0.01),
            "w2": w((kernel_size, hidden, hidden)),
            "b2": w((hidden,), 0.01),
        })
    return params


def _reference_forward(params, tokens):
    """Pure-JAX f32 reference (embedding gather + 'same' convs + masked pool)."""
    table = params["embedding"]
    stem_w = params["stem_w"]
    K = stem_w.shape[0]
    L = tokens.shape[1]
    pad_lo = (K - 1) // 2
    pad_hi = K - 1 - pad_lo

    def conv(x, w, b):
        xp = jnp.pad(x, ((0, 0), (pad_lo, pad_hi), (0, 0)))
        y = sum(jnp.einsum("blc,cd->bld", xp[:, k:k + L, :], w[k]) for k in range(K))
        return y + b

    emb = table[tokens]                                          # (B, L, E)
    h = jax.nn.relu(conv(emb, stem_w, params["stem_b"]))
    for blk in params["blocks"]:
        y = jax.nn.relu(conv(h, blk["w1"], blk["b1"]))
        h = jax.nn.relu(conv(y, blk["w2"], blk["b2"]) + h)
    mask = (tokens != PAD_TOKEN).astype(jnp.float32)[..., None]
    pooled = (h * mask).sum(1) / jnp.maximum(mask.sum(1), 1.0)
    logits = pooled @ params["head_w"] + params["head_b"]
    return logits, pooled


# ---------------------------------- main --------------------------------------


if __name__ == "__main__":
    B, L = 2, 8
    EMBED_DIM, HIDDEN, OUT_DIM = 32, 32, 16
    NUM_BLOCKS, KERNEL_SIZE = 2, 3

    key = jax.random.PRNGKey(0)
    k_tok, k_par = jax.random.split(key)

    tokens = jax.random.randint(k_tok, (B, L), 0, 256, dtype=jnp.int32)
    tokens = tokens.at[:, -2:].set(PAD_TOKEN)   # exercise masking

    params = init_params(k_par, EMBED_DIM, HIDDEN, OUT_DIM, NUM_BLOCKS, KERNEL_SIZE)

    fwd = jax.jit(functools.partial(embedding_to_resnet1d_masking, params))
    logits, embedding = fwd(tokens)
    jax.block_until_ready((logits, embedding))

    assert logits.shape == (B, OUT_DIM) and embedding.shape == (B, HIDDEN)
    assert bool(jnp.all(jnp.isfinite(logits))) and bool(jnp.all(jnp.isfinite(embedding)))

    # Correctness vs. a pure-JAX f32 reference (loose tol: kernel uses bf16 MXU operands).
    ref_logits, ref_emb = _reference_forward(params, tokens)
    assert bool(jnp.allclose(logits, ref_logits, rtol=5e-2, atol=1e-2))
    assert bool(jnp.allclose(embedding, ref_emb, rtol=5e-2, atol=1e-2))

    print("KERNEL_OK")
</pallas_src>

<mosaic_0001>
module attributes {stable_mosaic.version = 11 : i64} {
  func.func @_fused_forward_kernel(%arg0: i32, %arg1: memref<1x1x8xi32, #tpu.memory_space<vmem>>, %arg2: memref<771x32xbf16, #tpu.memory_space<vmem>>, %arg3: memref<1x32xf32, #tpu.memory_space<vmem>>, %arg4: memref<2x96x32xbf16, #tpu.memory_space<vmem>>, %arg5: memref<2x1x32xf32, #tpu.memory_space<vmem>>, %arg6: memref<2x96x32xbf16, #tpu.memory_space<vmem>>, %arg7: memref<2x1x32xf32, #tpu.memory_space<vmem>>, %arg8: memref<32x16xbf16, #tpu.memory_space<vmem>>, %arg9: memref<1x16xf32, #tpu.memory_space<vmem>>, %arg10: memref<1x1x16xf32, #tpu.memory_space<vmem>>, %arg11: memref<1x1x32xf32, #tpu.memory_space<vmem>>) attributes {dimension_semantics = [#tpu.dimension_semantics<parallel>], iteration_bounds = array<i64: 2>, scalar_prefetch = 0 : i64, scratch_operands = 0 : i64, tpu.core_type = #tpu.core_type<tc>, window_params = [{transform_indices = @transform_0, window_bounds = array<i64: 1, 1, 8>}, {pipeline_mode = #tpu.pipeline_mode<synchronous>, transform_indices = @transform_1, window_bounds = array<i64: 771, 32>}, {pipeline_mode = #tpu.pipeline_mode<synchronous>, transform_indices = @transform_2, window_bounds = array<i64: 1, 32>}, {pipeline_mode = #tpu.pipeline_mode<synchronous>, transform_indices = @transform_3, window_bounds = array<i64: 2, 96, 32>}, {pipeline_mode = #tpu.pipeline_mode<synchronous>, transform_indices = @transform_4, window_bounds = array<i64: 2, 1, 32>}, {pipeline_mode = #tpu.pipeline_mode<synchronous>, transform_indices = @transform_5, window_bounds = array<i64: 2, 96, 32>}, {pipeline_mode = #tpu.pipeline_mode<synchronous>, transform_indices = @transform_6, window_bounds = array<i64: 2, 1, 32>}, {pipeline_mode = #tpu.pipeline_mode<synchronous>, transform_indices = @transform_7, window_bounds = array<i64: 32, 16>}, {pipeline_mode = #tpu.pipeline_mode<synchronous>, transform_indices = @transform_8, window_bounds = array<i64: 1, 16>}, {transform_indices = @transform_9, window_bounds = array<i64: 1, 1, 16>}, {transform_indices = @transform_10, window_bounds = array<i64: 1, 1, 32>}]} {
    %c0 = arith.constant 0 : index
    %c0_0 = arith.constant 0 : index
    %c0_1 = arith.constant 0 : index
    %0 = vector.load %arg1[%c0, %c0_0, %c0_1] : memref<1x1x8xi32, #tpu.memory_space<vmem>>, vector<1x1x8xi32>
    %1 = vector.shape_cast %0 : vector<1x1x8xi32> to vector<1x8xi32>
    %2 = tpu.iota {dimensions = array<i32: 2>} : vector<1x8x257xi32>
    %3 = vector.shape_cast %1 : vector<1x8xi32> to vector<1x8x1xi32>
    %4 = vector.broadcast %3 : vector<1x8x1xi32> to vector<1x8x257xi32>
    %5 = arith.cmpi eq, %4, %2 : vector<1x8x257xi32>
    %6 = arith.extui %5 : vector<1x8x257xi1> to vector<1x8x257xi32>
    %7 = arith.sitofp %6 : vector<1x8x257xi32> to vector<1x8x257xf32>
    %8 = arith.truncf %7 : vector<1x8x257xf32> to vector<1x8x257xbf16>
    %cst = arith.constant 0.000000e+00 : bf16
    %9 = vector.broadcast %cst : bf16 to vector<1x1x257xbf16>
    %cst_2 = arith.constant 0.000000e+00 : bf16
    %10 = vector.broadcast %cst_2 : bf16 to vector<1x1x257xbf16>
    %11 = tpu.concatenate %9, %8, %10 in 1 : vector<1x1x257xbf16>, vector<1x8x257xbf16>, vector<1x1x257xbf16> -> vector<1x10x257xbf16>
    %12 = vector.extract_strided_slice %11 {offsets = [0, 0, 0], sizes = [1, 8, 257], strides = [1, 1, 1]} : vector<1x10x257xbf16> to vector<1x8x257xbf16>
    %13 = vector.extract_strided_slice %11 {offsets = [0, 1, 0], sizes = [1, 8, 257], strides = [1, 1, 1]} : vector<1x10x257xbf16> to vector<1x8x257xbf16>
    %14 = vector.extract_strided_slice %11 {offsets = [0, 2, 0], sizes = [1, 8, 257], strides = [1, 1, 1]} : vector<1x10x257xbf16> to vector<1x8x257xbf16>
    %15 = tpu.concatenate %12, %13, %14 in 2 : vector<1x8x257xbf16>, vector<1x8x257xbf16>, vector<1x8x257xbf16> -> vector<1x8x771xbf16>
    %16 = vector.shape_cast %15 : vector<1x8x771xbf16> to vector<8x771xbf16>
    %c0_3 = arith.constant 0 : index
    %c0_4 = arith.constant 0 : index
    %17 = vector.load %arg2[%c0_3, %c0_4] : memref<771x32xbf16, #tpu.memory_space<vmem>>, vector<771x32xbf16>
    %cst_5 = arith.constant dense<0.000000e+00> : vector<8x32xf32>
    %18 = tpu.matmul %16, %17, %cst_5 {dimension_numbers = #tpu.dot_dimension_numbers<[1], [0], [0], [1], [0, 0, 1, 1], [], []>} : vector<8x771xbf16>, vector<771x32xbf16>, vector<8x32xf32> -> vector<8x32xf32>
    %c0_6 = arith.constant 0 : index
    %c0_7 = arith.constant 0 : index
    %19 = vector.load %arg3[%c0_6, %c0_7] : memref<1x32xf32, #tpu.memory_space<vmem>>, vector<1x32xf32>
    %20 = vector.broadcast %19 : vector<1x32xf32> to vector<8x32xf32>
    %21 = arith.addf %18, %20 : vector<8x32xf32>
    %cst_8 = arith.constant 0.000000e+00 : f32
    %22 = vector.broadcast %cst_8 : f32 to vector<8x32xf32>
    %23 = arith.maximumf %21, %22 : vector<8x32xf32>
    %24 = vector.shape_cast %23 : vector<8x32xf32> to vector<1x8x32xf32>
    %c0_9 = arith.constant 0 : index
    %c0_10 = arith.constant 0 : index
    %c0_11 = arith.constant 0 : index
    %25 = vector.load %arg4[%c0_9, %c0_10, %c0_11] : memref<2x96x32xbf16, #tpu.memory_space<vmem>>, vector<1x96x32xbf16>
    %26 = vector.shape_cast %25 : vector<1x96x32xbf16> to vector<96x32xbf16>
    %c0_12 = arith.constant 0 : index
    %c0_13 = arith.constant 0 : index
    %c0_14 = arith.constant 0 : index
    %27 = vector.load %arg5[%c0_12, %c0_13, %c0_14] : memref<2x1x32xf32, #tpu.memory_space<vmem>>, vector<1x1x32xf32>
    %28 = vector.shape_cast %27 : vector<1x1x32xf32> to vector<1x32xf32>
    %29 = arith.truncf %24 : vector<1x8x32xf32> to vector<1x8x32xbf16>
    %cst_15 = arith.constant 0.000000e+00 : bf16
    %30 = vector.broadcast %cst_15 : bf16 to vector<1x1x32xbf16>
    %cst_16 = arith.constant 0.000000e+00 : bf16
    %31 = vector.broadcast %cst_16 : bf16 to vector<1x1x32xbf16>
    %32 = tpu.concatenate %30, %29, %31 in 1 : vector<1x1x32xbf16>, vector<1x8x32xbf16>, vector<1x1x32xbf16> -> vector<1x10x32xbf16>
    %33 = vector.extract_strided_slice %32 {offsets = [0, 0, 0], sizes = [1, 8, 32], strides = [1, 1, 1]} : vector<1x10x32xbf16> to vector<1x8x32xbf16>
    %34 = vector.extract_strided_slice %32 {offsets = [0, 1, 0], sizes = [1, 8, 32], strides = [1, 1, 1]} : vector<1x10x32xbf16> to vector<1x8x32xbf16>
    %35 = vector.extract_strided_slice %32 {offsets = [0, 2, 0], sizes = [1, 8, 32], strides = [1, 1, 1]} : vector<1x10x32xbf16> to vector<1x8x32xbf16>
    %36 = tpu.concatenate %33, %34, %35 in 2 : vector<1x8x32xbf16>, vector<1x8x32xbf16>, vector<1x8x32xbf16> -> vector<1x8x96xbf16>
    %37 = vector.shape_cast %36 : vector<1x8x96xbf16> to vector<8x96xbf16>
    %cst_17 = arith.constant dense<0.000000e+00> : vector<8x32xf32>
    %38 = tpu.matmul %37, %26, %cst_17 {dimension_numbers = #tpu.dot_dimension_numbers<[1], [0], [0], [1], [0, 0, 1, 1], [], []>} : vector<8x96xbf16>, vector<96x32xbf16>, vector<8x32xf32> -> vector<8x32xf32>
    %39 = vector.broadcast %28 : vector<1x32xf32> to vector<8x32xf32>
    %40 = arith.addf %38, %39 : vector<8x32xf32>
    %41 = vector.shape_cast %40 : vector<8x32xf32> to vector<1x8x32xf32>
    %cst_18 = arith.constant 0.000000e+00 : f32
    %42 = vector.broadcast %cst_18 : f32 to vector<1x8x32xf32>
    %43 = arith.maximumf %41, %42 : vector<1x8x32xf32>
    %c0_19 = arith.constant 0 : index
    %c0_20 = arith.constant 0 : index
    %c0_21 = arith.constant 0 : index
    %44 = vector.load %arg6[%c0_19, %c0_20, %c0_21] : memref<2x96x32xbf16, #tpu.memory_space<vmem>>, vector<1x96x32xbf16>
    %45 = vector.shape_cast %44 : vector<1x96x32xbf16> to vector<96x32xbf16>
    %c0_22 = arith.constant 0 : index
    %c0_23 = arith.constant 0 : index
    %c0_24 = arith.constant 0 : index
    %46 = vector.load %arg7[%c0_22, %c0_23, %c0_24] : memref<2x1x32xf32, #tpu.memory_space<vmem>>, vector<1x1x32xf32>
    %47 = vector.shape_cast %46 : vector<1x1x32xf32> to vector<1x32xf32>
    %48 = arith.truncf %43 : vector<1x8x32xf32> to vector<1x8x32xbf16>
    %cst_25 = arith.constant 0.000000e+00 : bf16
    %49 = vector.broadcast %cst_25 : bf16 to vector<1x1x32xbf16>
    %cst_26 = arith.constant 0.000000e+00 : bf16
    %50 = vector.broadcast %cst_26 : bf16 to vector<1x1x32xbf16>
    %51 = tpu.concatenate %49, %48, %50 in 1 : vector<1x1x32xbf16>, vector<1x8x32xbf16>, vector<1x1x32xbf16> -> vector<1x10x32xbf16>
    %52 = vector.extract_strided_slice %51 {offsets = [0, 0, 0], sizes = [1, 8, 32], strides = [1, 1, 1]} : vector<1x10x32xbf16> to vector<1x8x32xbf16>
    %53 = vector.extract_strided_slice %51 {offsets = [0, 1, 0], sizes = [1, 8, 32], strides = [1, 1, 1]} : vector<1x10x32xbf16> to vector<1x8x32xbf16>
    %54 = vector.extract_strided_slice %51 {offsets = [0, 2, 0], sizes = [1, 8, 32], strides = [1, 1, 1]} : vector<1x10x32xbf16> to vector<1x8x32xbf16>
    %55 = tpu.concatenate %52, %53, %54 in 2 : vector<1x8x32xbf16>, vector<1x8x32xbf16>, vector<1x8x32xbf16> -> vector<1x8x96xbf16>
    %56 = vector.shape_cast %55 : vector<1x8x96xbf16> to vector<8x96xbf16>
    %cst_27 = arith.constant dense<0.000000e+00> : vector<8x32xf32>
    %57 = tpu.matmul %56, %45, %cst_27 {dimension_numbers = #tpu.dot_dimension_numbers<[1], [0], [0], [1], [0, 0, 1, 1], [], []>} : vector<8x96xbf16>, vector<96x32xbf16>, vector<8x32xf32> -> vector<8x32xf32>
    %58 = vector.broadcast %47 : vector<1x32xf32> to vector<8x32xf32>
    %59 = arith.addf %57, %58 : vector<8x32xf32>
    %60 = vector.shape_cast %59 : vector<8x32xf32> to vector<1x8x32xf32>
    %61 = arith.addf %60, %24 : vector<1x8x32xf32>
    %cst_28 = arith.constant 0.000000e+00 : f32
    %62 = vector.broadcast %cst_28 : f32 to vector<1x8x32xf32>
    %63 = arith.maximumf %61, %62 : vector<1x8x32xf32>
    %c1 = arith.constant 1 : index
    %c0_29 = arith.constant 0 : index
    %c0_30 = arith.constant 0 : index
    %64 = vector.load %arg4[%c1, %c0_29, %c0_30] : memref<2x96x32xbf16, #tpu.memory_space<vmem>>, vector<1x96x32xbf16>
    %65 = vector.shape_cast %64 : vector<1x96x32xbf16> to vector<96x32xbf16>
    %c1_31 = arith.constant 1 : index
    %c0_32 = arith.constant 0 : index
    %c0_33 = arith.constant 0 : index
    %66 = vector.load %arg5[%c1_31, %c0_32, %c0_33] : memref<2x1x32xf32, #tpu.memory_space<vmem>>, vector<1x1x32xf32>
    %67 = vector.shape_cast %66 : vector<1x1x32xf32> to vector<1x32xf32>
    %68 = arith.truncf %63 : vector<1x8x32xf32> to vector<1x8x32xbf16>
    %cst_34 = arith.constant 0.000000e+00 : bf16
    %69 = vector.broadcast %cst_34 : bf16 to vector<1x1x32xbf16>
    %cst_35 = arith.constant 0.000000e+00 : bf16
    %70 = vector.broadcast %cst_35 : bf16 to vector<1x1x32xbf16>
    %71 = tpu.concatenate %69, %68, %70 in 1 : vector<1x1x32xbf16>, vector<1x8x32xbf16>, vector<1x1x32xbf16> -> vector<1x10x32xbf16>
    %72 = vector.extract_strided_slice %71 {offsets = [0, 0, 0], sizes = [1, 8, 32], strides = [1, 1, 1]} : vector<1x10x32xbf16> to vector<1x8x32xbf16>
    %73 = vector.extract_strided_slice %71 {offsets = [0, 1, 0], sizes = [1, 8, 32], strides = [1, 1, 1]} : vector<1x10x32xbf16> to vector<1x8x32xbf16>
    %74 = vector.extract_strided_slice %71 {offsets = [0, 2, 0], sizes = [1, 8, 32], strides = [1, 1, 1]} : vector<1x10x32xbf16> to vector<1x8x32xbf16>
    %75 = tpu.concatenate %72, %73, %74 in 2 : vector<1x8x32xbf16>, vector<1x8x32xbf16>, vector<1x8x32xbf16> -> vector<1x8x96xbf16>
    %76 = vector.shape_cast %75 : vector<1x8x96xbf16> to vector<8x96xbf16>
    %cst_36 = arith.constant dense<0.000000e+00> : vector<8x32xf32>
    %77 = tpu.matmul %76, %65, %cst_36 {dimension_numbers = #tpu.dot_dimension_numbers<[1], [0], [0], [1], [0, 0, 1, 1], [], []>} : vector<8x96xbf16>, vector<96x32xbf16>, vector<8x32xf32> -> vector<8x32xf32>
    %78 = vector.broadcast %67 : vector<1x32xf32> to vector<8x32xf32>
    %79 = arith.addf %77, %78 : vector<8x32xf32>
    %80 = vector.shape_cast %79 : vector<8x32xf32> to vector<1x8x32xf32>
    %cst_37 = arith.constant 0.000000e+00 : f32
    %81 = vector.broadcast %cst_37 : f32 to vector<1x8x32xf32>
    %82 = arith.maximumf %80, %81 : vector<1x8x32xf32>
    %c1_38 = arith.constant 1 : index
    %c0_39 = arith.constant 0 : index
    %c0_40 = arith.constant 0 : index
    %83 = vector.load %arg6[%c1_38, %c0_39, %c0_40] : memref<2x96x32xbf16, #tpu.memory_space<vmem>>, vector<1x96x32xbf16>
    %84 = vector.shape_cast %83 : vector<1x96x32xbf16> to vector<96x32xbf16>
    %c1_41 = arith.constant 1 : index
    %c0_42 = arith.constant 0 : index
    %c0_43 = arith.constant 0 : index
    %85 = vector.load %arg7[%c1_41, %c0_42, %c0_43] : memref<2x1x32xf32, #tpu.memory_space<vmem>>, vector<1x1x32xf32>
    %86 = vector.shape_cast %85 : vector<1x1x32xf32> to vector<1x32xf32>
    %87 = arith.truncf %82 : vector<1x8x32xf32> to vector<1x8x32xbf16>
    %cst_44 = arith.constant 0.000000e+00 : bf16
    %88 = vector.broadcast %cst_44 : bf16 to vector<1x1x32xbf16>
    %cst_45 = arith.constant 0.000000e+00 : bf16
    %89 = vector.broadcast %cst_45 : bf16 to vector<1x1x32xbf16>
    %90 = tpu.concatenate %88, %87, %89 in 1 : vector<1x1x32xbf16>, vector<1x8x32xbf16>, vector<1x1x32xbf16> -> vector<1x10x32xbf16>
    %91 = vector.extract_strided_slice %90 {offsets = [0, 0, 0], sizes = [1, 8, 32], strides = [1, 1, 1]} : vector<1x10x32xbf16> to vector<1x8x32xbf16>
    %92 = vector.extract_strided_slice %90 {offsets = [0, 1, 0], sizes = [1, 8, 32], strides = [1, 1, 1]} : vector<1x10x32xbf16> to vector<1x8x32xbf16>
    %93 = vector.extract_strided_slice %90 {offsets = [0, 2, 0], sizes = [1, 8, 32], strides = [1, 1, 1]} : vector<1x10x32xbf16> to vector<1x8x32xbf16>
    %94 = tpu.concatenate %91, %92, %93 in 2 : vector<1x8x32xbf16>, vector<1x8x32xbf16>, vector<1x8x32xbf16> -> vector<1x8x96xbf16>
    %95 = vector.shape_cast %94 : vector<1x8x96xbf16> to vector<8x96xbf16>
    %cst_46 = arith.constant dense<0.000000e+00> : vector<8x32xf32>
    %96 = tpu.matmul %95, %84, %cst_46 {dimension_numbers = #tpu.dot_dimension_numbers<[1], [0], [0], [1], [0, 0, 1, 1], [], []>} : vector<8x96xbf16>, vector<96x32xbf16>, vector<8x32xf32> -> vector<8x32xf32>
    %97 = vector.broadcast %86 : vector<1x32xf32> to vector<8x32xf32>
    %98 = arith.addf %96, %97 : vector<8x32xf32>
    %99 = vector.shape_cast %98 : vector<8x32xf32> to vector<1x8x32xf32>
    %100 = arith.addf %99, %63 : vector<1x8x32xf32>
    %cst_47 = arith.constant 0.000000e+00 : f32
    %101 = vector.broadcast %cst_47 : f32 to vector<1x8x32xf32>
    %102 = arith.maximumf %100, %101 : vector<1x8x32xf32>
    %c256_i32 = arith.constant 256 : i32
    %103 = vector.broadcast %c256_i32 : i32 to vector<1x8xi32>
    %104 = arith.cmpi ne, %1, %103 : vector<1x8xi32>
    %105 = arith.extui %104 : vector<1x8xi1> to vector<1x8xi32>
    %106 = arith.sitofp %105 : vector<1x8xi32> to vector<1x8xf32>
    %107 = vector.shape_cast %106 : vector<1x8xf32> to vector<1x8x1xf32>
    %108 = vector.broadcast %107 : vector<1x8x1xf32> to vector<1x8x32xf32>
    %109 = arith.mulf %102, %108 : vector<1x8x32xf32>
    %cst_48 = arith.constant dense<0.000000e+00> : vector<1x32xf32>
    %110 = vector.multi_reduction <add>, %109, %cst_48 [1] : vector<1x8x32xf32> to vector<1x32xf32>
    %cst_49 = arith.constant dense<0.000000e+00> : vector<1x1xf32>
    %111 = vector.multi_reduction <add>, %107, %cst_49 [1] : vector<1x8x1xf32> to vector<1x1xf32>
    %cst_50 = arith.constant 1.000000e+00 : f32
    %112 = vector.broadcast %cst_50 : f32 to vector<1x1xf32>
    %113 = arith.maximumf %111, %112 : vector<1x1xf32>
    %114 = vector.broadcast %113 : vector<1x1xf32> to vector<1x32xf32>
    %115 = arith.divf %110, %114 : vector<1x32xf32>
    %116 = arith.truncf %115 : vector<1x32xf32> to vector<1x32xbf16>
    %c0_51 = arith.constant 0 : index
    %c0_52 = arith.constant 0 : index
    %117 = vector.load %arg8[%c0_51, %c0_52] : memref<32x16xbf16, #tpu.memory_space<vmem>>, vector<32x16xbf16>
    %cst_53 = arith.constant dense<0.000000e+00> : vector<1x16xf32>
    %118 = tpu.matmul %116, %117, %cst_53 {dimension_numbers = #tpu.dot_dimension_numbers<[1], [0], [0], [1], [0, 0, 1, 1], [], []>} : vector<1x32xbf16>, vector<32x16xbf16>, vector<1x16xf32> -> vector<1x16xf32>
    %c0_54 = arith.constant 0 : index
    %c0_55 = arith.constant 0 : index
    %119 = vector.load %arg9[%c0_54, %c0_55] : memref<1x16xf32, #tpu.memory_space<vmem>>, vector<1x16xf32>
    %120 = arith.addf %118, %119 : vector<1x16xf32>
    %121 = vector.shape_cast %115 : vector<1x32xf32> to vector<1x1x32xf32>
    %c0_56 = arith.constant 0 : index
    %c0_57 = arith.constant 0 : index
    %c0_58 = arith.constant 0 : index
    %122 = vector.load %arg11[%c0_56, %c0_57, %c0_58] : memref<1x1x32xf32, #tpu.memory_space<vmem>>, vector<1x1x32xf32>
    tpu.vector_store %arg11[%c0_56, %c0_57, %c0_58], %121 {strides = array<i32>} : memref<1x1x32xf32, #tpu.memory_space<vmem>>, vector<1x1x32xf32>,
    %123 = vector.shape_cast %120 : vector<1x16xf32> to vector<1x1x16xf32>
    %c0_59 = arith.constant 0 : index
    %c0_60 = arith.constant 0 : index
    %c0_61 = arith.constant 0 : index
    %124 = vector.load %arg10[%c0_59, %c0_60, %c0_61] : memref<1x1x16xf32, #tpu.memory_space<vmem>>, vector<1x1x16xf32>
    tpu.vector_store %arg10[%c0_59, %c0_60, %c0_61], %123 {strides = array<i32>} : memref<1x1x16xf32, #tpu.memory_space<vmem>>, vector<1x1x16xf32>,
    return
  }
  func.func @transform_0(%arg0: i32) -> (i32, i32, i32) {
    %c0_i32 = arith.constant 0 : i32
    %c0_i32_0 = arith.constant 0 : i32
    %c0_i32_1 = arith.constant 0 : i32
    return %arg0, %c0_i32, %c0_i32_0 : i32, i32, i32
  }
  func.func @transform_1(%arg0: i32) -> (i32, i32) {
    %c0_i32 = arith.constant 0 : i32
    %c0_i32_0 = arith.constant 0 : i32
    %c0_i32_1 = arith.constant 0 : i32
    return %c0_i32, %c0_i32_0 : i32, i32
  }
  func.func @transform_2(%arg0: i32) -> (i32, i32) {
    %c0_i32 = arith.constant 0 : i32
    %c0_i32_0 = arith.constant 0 : i32
    %c0_i32_1 = arith.constant 0 : i32
    return %c0_i32, %c0_i32_0 : i32, i32
  }
  func.func @transform_3(%arg0: i32) -> (i32, i32, i32) {
    %c0_i32 = arith.constant 0 : i32
    %c0_i32_0 = arith.constant 0 : i32
    %c0_i32_1 = arith.constant 0 : i32
    %c0_i32_2 = arith.constant 0 : i32
    return %c0_i32, %c0_i32_0, %c0_i32_1 : i32, i32, i32
  }
  func.func @transform_4(%arg0: i32) -> (i32, i32, i32) {
    %c0_i32 = arith.constant 0 : i32
    %c0_i32_0 = arith.constant 0 : i32
    %c0_i32_1 = arith.constant 0 : i32
    %c0_i32_2 = arith.constant 0 : i32
    return %c0_i32, %c0_i32_0, %c0_i32_1 : i32, i32, i32
  }
  func.func @transform_5(%arg0: i32) -> (i32, i32, i32) {
    %c0_i32 = arith.constant 0 : i32
    %c0_i32_0 = arith.constant 0 : i32
    %c0_i32_1 = arith.constant 0 : i32
    %c0_i32_2 = arith.constant 0 : i32
    return %c0_i32, %c0_i32_0, %c0_i32_1 : i32, i32, i32
  }
  func.func @transform_6(%arg0: i32) -> (i32, i32, i32) {
    %c0_i32 = arith.constant 0 : i32
    %c0_i32_0 = arith.constant 0 : i32
    %c0_i32_1 = arith.constant 0 : i32
    %c0_i32_2 = arith.constant 0 : i32
    return %c0_i32, %c0_i32_0, %c0_i32_1 : i32, i32, i32
  }
  func.func @transform_7(%arg0: i32) -> (i32, i32) {
    %c0_i32 = arith.constant 0 : i32
    %c0_i32_0 = arith.constant 0 : i32
    %c0_i32_1 = arith.constant 0 : i32
    return %c0_i32, %c0_i32_0 : i32, i32
  }
  func.func @transform_8(%arg0: i32) -> (i32, i32) {
    %c0_i32 = arith.constant 0 : i32
    %c0_i32_0 = arith.constant 0 : i32
    %c0_i32_1 = arith.constant 0 : i32
    return %c0_i32, %c0_i32_0 : i32, i32
  }
  func.func @transform_9(%arg0: i32) -> (i32, i32, i32) {
    %c0_i32 = arith.constant 0 : i32
    %c0_i32_0 = arith.constant 0 : i32
    %c0_i32_1 = arith.constant 0 : i32
    return %arg0, %c0_i32, %c0_i32_0 : i32, i32, i32
  }
  func.func @transform_10(%arg0: i32) -> (i32, i32, i32) {
    %c0_i32 = arith.constant 0 : i32
    %c0_i32_0 = arith.constant 0 : i32
    %c0_i32_1 = arith.constant 0 : i32
    return %arg0, %c0_i32, %c0_i32_0 : i32, i32, i32
  }
}

</mosaic_0001>

<llo_original>
// kernel: embedding_to_resnet1d_masking.1
$region0: #{embedding_to_resnet1d_masking.1}
  #allocation0 [shape = 'u32[]', space=smem, size = 0x4, offset = 0x4, fixed_abs, tag = 'smem constant byte address 0x4 - core index']
  #allocation1 [shape = 'u32[72,128]{1,0:T(1,128)}', space=vmem, size = 0x9000, scoped, tag = 'internal scratch']
  %s0 = inlined_call_operand.hbm [shape: s32[2,1,8], index: 0, kind: input, shape index: {}]
  %s1 = inlined_call_operand.hbm [shape: bf16[771,32], index: 1, kind: input, shape index: {}]
  %s2 = inlined_call_operand.vmem [shape: f32[1,32], index: 2, kind: input, shape index: {}]
  %s3 = inlined_call_operand.hbm [shape: bf16[2,96,32], index: 3, kind: input, shape index: {}]
  %s4 = inlined_call_operand.vmem [shape: f32[2,1,32], index: 4, kind: input, shape index: {}]
  %s5 = inlined_call_operand.hbm [shape: bf16[2,96,32], index: 5, kind: input, shape index: {}]
  %s6 = inlined_call_operand.hbm [shape: f32[2,1,32], index: 6, kind: input, shape index: {}]
  %s7 = inlined_call_operand.hbm [shape: bf16[32,16], index: 7, kind: input, shape index: {}]
  %s8 = inlined_call_operand.hbm [shape: f32[1,16], index: 8, kind: input, shape index: {}]
  %s9 = inlined_call_operand.hbm [shape: f32[2,1,16], index: 9, kind: output, shape index: {0}]
  %s10 = inlined_call_operand.hbm [shape: f32[2,1,32], index: 10, kind: output, shape index: {1}]
  %11 = xla_tuple %s9, %s10
  %s12 = sld [smem:[#allocation0]]
  $region105: #{embedding_to_resnet1d_masking.1} parent=0
    _
  %s14 = ssub.s32 1, %s12
  %s15 = scalar_select 0, %s14, %s12
  $region1: #{embedding_to_resnet1d_masking.1} parent=0
    #allocation2 [shape = 'u8[1024]{0}', space=vmem, size = 0x400, scoped, tag = 'input window, operand 0']
    #allocation3 [shape = 's32[2]{0}', space=sflag, size = 0x8, scoped, tag = 'scoped memory for embedding_to_resnet1d_masking.1']
    #allocation4 [shape = 's32[2]{0}', space=sflag, size = 0x8, scoped, tag = 'scoped memory for embedding_to_resnet1d_masking.1']
    #allocation5 [shape = 'u8[198656]{0}', space=vmem, size = 0x30800, scoped, tag = 'input window, operand 1, single buffered']
    #allocation6 [shape = 's32[1]{0}', space=sflag, size = 0x4, scoped, tag = 'scoped memory for embedding_to_resnet1d_masking.1']
    #allocation7 [shape = 'u8[49152]{0}', space=vmem, size = 0xc000, scoped, tag = 'input window, operand 3, single buffered']
    #allocation8 [shape = 'u8[49152]{0}', space=vmem, size = 0xc000, scoped, tag = 'input window, operand 5, single buffered']
    #allocation9 [shape = 's32[1]{0}', space=sflag, size = 0x4, scoped, tag = 'scoped memory for embedding_to_resnet1d_masking.1']
    #allocation10 [shape = 'u8[1024]{0}', space=vmem, size = 0x400, scoped, tag = 'input window, operand 6, single buffered']
    #allocation11 [shape = 'u8[8192]{0}', space=vmem, size = 0x2000, scoped, tag = 'input window, operand 7, single buffered']
    #allocation12 [shape = 's32[1]{0}', space=sflag, size = 0x4, scoped, tag = 'scoped memory for embedding_to_resnet1d_masking.1']
    #allocation13 [shape = 'u8[512]{0}', space=vmem, size = 0x400, scoped, tag = 'input window, operand 8, single buffered']
    #allocation14 [shape = 'u8[1024]{0}', space=vmem, size = 0x400, scoped, tag = 'output window, operand 0']
    #allocation15 [shape = 'u8[1024]{0}', space=vmem, size = 0x400, scoped, tag = 'output window, operand 1']
    #allocation16 [shape = 's32[2]{0}', space=sflag, size = 0x8, scoped, tag = 'scoped memory for embedding_to_resnet1d_masking.1']
    %16 = vsyncpa [#allocation3], 0
    %s17 = scalar_lea.sflag [#allocation3], 1
    %18 = vsyncpa %s17, 0
    %19 = vsyncpa [#allocation6], 0
    %20 = vsyncpa [#allocation9], 0
    %21 = vsyncpa [#allocation12], 0
    %22 = vsyncpa [#allocation4], 0
    %s23 = scalar_lea.sflag [#allocation4], 1
    %24 = vsyncpa %s23, 0
    %25 = vsyncpa [#allocation16], 0
    %s26 = scalar_lea.sflag [#allocation16], 1
    %27 = vsyncpa %s26, 0
    loop: start=0, step=1, limit=4
    $region2: #{embedding_to_resnet1d_masking.1} parent=1 // loop_pre_header
      _
    $region3: #{embedding_to_resnet1d_masking.1} parent=1 // loop_header
      %s29 = sphi 0, %s33
      %p30 = scmp.ge.s32.totalorder %s29, 4
      %s39 = sphi 0, %s41
      %s42 = sphi 0, %s39
      %s43 = sphi 0, %s42
      %s59 = sphi 0, %s43
      %s63 = sphi 0, %s63
      %s65 = sphi 0, %s63
      %s66 = sphi 0, %s65
      %s80 = sphi 0, %s66
      %s84 = sphi 0, %s84
      %s86 = sphi 0, %s84
      %s87 = sphi 0, %s86
      %s101 = sphi 0, %s87
      %s105 = sphi 0, %s105
      %s107 = sphi 0, %s105
      %s108 = sphi 0, %s107
      %s122 = sphi 0, %s108
      %s126 = sphi 0, %s126
      %s128 = sphi 0, %s126
      %s129 = sphi 0, %s128
      %s143 = sphi 0, %s129
      %s147 = sphi 0, %s147
      %s149 = sphi 0, %s147
      %s150 = sphi 0, %s149
      %s164 = sphi 0, %s150
      %s168 = sphi 0, %s168
      %s170 = sphi 0, %s168
      %s171 = sphi 0, %s170
      %s185 = sphi 0, %s171
      %s189 = sphi 0, %s189
      %s191 = sphi 0, %s189
      %s192 = sphi 0, %s191
      %s206 = sphi 0, %s192
      %s210 = sphi 0, %s210
      %s212 = sphi 0, %s210
      %s213 = sphi 0, %s212
      %s227 = sphi 0, %s213
      %s233 = sphi 0, %s235
      %s236 = sphi 0, %s233
      %s237 = sphi 0, %s236
      %s253 = sphi 0, %s237
      %s259 = sphi 0, %s261
      %s262 = sphi 0, %s259
      %s263 = sphi 0, %s262
      %s279 = sphi 0, %s263
    $region4: #{embedding_to_resnet1d_masking.1} parent=1 // loop_header_branch
      %32 = sbr.rel (%p30) target = $region8
    $region5: #{embedding_to_resnet1d_masking.1} parent=1 // loop_body
      %s34 = ssub.s32 %s29, 1
      %s35 = ssub.s32 %s29, 2
      %s36 = sadd.s32 %s29, 1
      %s37 = ssub.s32 %s29, %s36
      %p38 = scmp.eq.s32.totalorder %s37, 0
      %s40 = sadd.s32 %s39, 1
      %s41 = scalar_select %p38, %s39, %s40
      %p44 = pneg %p38
      %p45 = scmp.eq.s32.totalorder %s29, 1
      %p46 = por %p44, %p45
      %p47 = scmp.ne.s32.totalorder %s39, %s42
      %p48 = scmp.eq.s32.totalorder %s29, 0
      %p49 = por %p47, %p48
      %p50 = scmp.ne.s32.totalorder %s39, %s42
      %p51 = scmp.eq.s32.totalorder %s34, 1
      %p52 = por %p50, %p51
      %p53 = scmp.ne.s32.totalorder %s42, %s43
      %p54 = scmp.eq.s32.totalorder %s34, 0
      %p55 = por %p53, %p54
      %p56 = scmp.ne.s32.totalorder %s42, %s43
      %p57 = scmp.eq.s32.totalorder %s35, 1
      %p58 = por %p56, %p57
      %p60 = scmp.ne.s32.totalorder %s43, %s59
      %p61 = scmp.eq.s32.totalorder %s35, 0
      %p62 = por %p60, %p61
      %s64 = sadd.s32 %s63, 1
      %p67 = scmp.eq.s32.totalorder %s29, 1
      %p68 = scmp.ne.s32.totalorder %s63, %s65
      %p69 = scmp.eq.s32.totalorder %s29, 0
      %p70 = por %p68, %p69
      %p71 = scmp.ne.s32.totalorder %s63, %s65
      %p72 = scmp.eq.s32.totalorder %s34, 1
      %p73 = por %p71, %p72
      %p74 = scmp.ne.s32.totalorder %s65, %s66
      %p75 = scmp.eq.s32.totalorder %s34, 0
      %p76 = por %p74, %p75
      %p77 = scmp.ne.s32.totalorder %s65, %s66
      %p78 = scmp.eq.s32.totalorder %s35, 1
      %p79 = por %p77, %p78
      %p81 = scmp.ne.s32.totalorder %s66, %s80
      %p82 = scmp.eq.s32.totalorder %s35, 0
      %p83 = por %p81, %p82
      %s85 = sadd.s32 %s84, 1
      %p88 = scmp.eq.s32.totalorder %s29, 1
      %p89 = scmp.ne.s32.totalorder %s84, %s86
      %p90 = scmp.eq.s32.totalorder %s29, 0
      %p91 = por %p89, %p90
      %p92 = scmp.ne.s32.totalorder %s84, %s86
      %p93 = scmp.eq.s32.totalorder %s34, 1
      %p94 = por %p92, %p93
      %p95 = scmp.ne.s32.totalorder %s86, %s87
      %p96 = scmp.eq.s32.totalorder %s34, 0
      %p97 = por %p95, %p96
      %p98 = scmp.ne.s32.totalorder %s86, %s87
      %p99 = scmp.eq.s32.totalorder %s35, 1
      %p100 = por %p98, %p99
      %p102 = scmp.ne.s32.totalorder %s87, %s101
      %p103 = scmp.eq.s32.totalorder %s35, 0
      %p104 = por %p102, %p103
      %s106 = sadd.s32 %s105, 1
      %p109 = scmp.eq.s32.totalorder %s29, 1
      %p110 = scmp.ne.s32.totalorder %s105, %s107
      %p111 = scmp.eq.s32.totalorder %s29, 0
      %p112 = por %p110, %p111
      %p113 = scmp.ne.s32.totalorder %s105, %s107
      %p114 = scmp.eq.s32.totalorder %s34, 1
      %p115 = por %p113, %p114
      %p116 = scmp.ne.s32.totalorder %s107, %s108
      %p117 = scmp.eq.s32.totalorder %s34, 0
      %p118 = por %p116, %p117
      %p119 = scmp.ne.s32.totalorder %s107, %s108
      %p120 = scmp.eq.s32.totalorder %s35, 1
      %p121 = por %p119, %p120
      %p123 = scmp.ne.s32.totalorder %s108, %s122
      %p124 = scmp.eq.s32.totalorder %s35, 0
      %p125 = por %p123, %p124
      %s127 = sadd.s32 %s126, 1
      %p130 = scmp.eq.s32.totalorder %s29, 1
      %p131 = scmp.ne.s32.totalorder %s126, %s128
      %p132 = scmp.eq.s32.totalorder %s29, 0
      %p133 = por %p131, %p132
      %p134 = scmp.ne.s32.totalorder %s126, %s128
      %p135 = scmp.eq.s32.totalorder %s34, 1
      %p136 = por %p134, %p135
      %p137 = scmp.ne.s32.totalorder %s128, %s129
      %p138 = scmp.eq.s32.totalorder %s34, 0
      %p139 = por %p137, %p138
      %p140 = scmp.ne.s32.totalorder %s128, %s129
      %p141 = scmp.eq.s32.totalorder %s35, 1
      %p142 = por %p140, %p141
      %p144 = scmp.ne.s32.totalorder %s129, %s143
      %p145 = scmp.eq.s32.totalorder %s35, 0
      %p146 = por %p144, %p145
      %s148 = sadd.s32 %s147, 1
      %p151 = scmp.eq.s32.totalorder %s29, 1
      %p152 = scmp.ne.s32.totalorder %s147, %s149
      %p153 = scmp.eq.s32.totalorder %s29, 0
      %p154 = por %p152, %p153
      %p155 = scmp.ne.s32.totalorder %s147, %s149
      %p156 = scmp.eq.s32.totalorder %s34, 1
      %p157 = por %p155, %p156
      %p158 = scmp.ne.s32.totalorder %s149, %s150
      %p159 = scmp.eq.s32.totalorder %s34, 0
      %p160 = por %p158, %p159
      %p161 = scmp.ne.s32.totalorder %s149, %s150
      %p162 = scmp.eq.s32.totalorder %s35, 1
      %p163 = por %p161, %p162
      %p165 = scmp.ne.s32.totalorder %s150, %s164
      %p166 = scmp.eq.s32.totalorder %s35, 0
      %p167 = por %p165, %p166
      %s169 = sadd.s32 %s168, 1
      %p172 = scmp.eq.s32.totalorder %s29, 1
      %p173 = scmp.ne.s32.totalorder %s168, %s170
      %p174 = scmp.eq.s32.totalorder %s29, 0
      %p175 = por %p173, %p174
      %p176 = scmp.ne.s32.totalorder %s168, %s170
      %p177 = scmp.eq.s32.totalorder %s34, 1
      %p178 = por %p176, %p177
      %p179 = scmp.ne.s32.totalorder %s170, %s171
      %p180 = scmp.eq.s32.totalorder %s34, 0
      %p181 = por %p179, %p180
      %p182 = scmp.ne.s32.totalorder %s170, %s171
      %p183 = scmp.eq.s32.totalorder %s35, 1
      %p184 = por %p182, %p183
      %p186 = scmp.ne.s32.totalorder %s171, %s185
      %p187 = scmp.eq.s32.totalorder %s35, 0
      %p188 = por %p186, %p187
      %s190 = sadd.s32 %s189, 1
      %p193 = scmp.eq.s32.totalorder %s29, 1
      %p194 = scmp.ne.s32.totalorder %s189, %s191
      %p195 = scmp.eq.s32.totalorder %s29, 0
      %p196 = por %p194, %p195
      %p197 = scmp.ne.s32.totalorder %s189, %s191
      %p198 = scmp.eq.s32.totalorder %s34, 1
      %p199 = por %p197, %p198
      %p200 = scmp.ne.s32.totalorder %s191, %s192
      %p201 = scmp.eq.s32.totalorder %s34, 0
      %p202 = por %p200, %p201
      %p203 = scmp.ne.s32.totalorder %s191, %s192
      %p204 = scmp.eq.s32.totalorder %s35, 1
      %p205 = por %p203, %p204
      %p207 = scmp.ne.s32.totalorder %s192, %s206
      %p208 = scmp.eq.s32.totalorder %s35, 0
      %p209 = por %p207, %p208
      %s211 = sadd.s32 %s210, 1
      %p214 = scmp.eq.s32.totalorder %s29, 1
      %p215 = scmp.ne.s32.totalorder %s210, %s212
      %p216 = scmp.eq.s32.totalorder %s29, 0
      %p217 = por %p215, %p216
      %p218 = scmp.ne.s32.totalorder %s210, %s212
      %p219 = scmp.eq.s32.totalorder %s34, 1
      %p220 = por %p218, %p219
      %p221 = scmp.ne.s32.totalorder %s212, %s213
      %p222 = scmp.eq.s32.totalorder %s34, 0
      %p223 = por %p221, %p222
      %p224 = scmp.ne.s32.totalorder %s212, %s213
      %p225 = scmp.eq.s32.totalorder %s35, 1
      %p226 = por %p224, %p225
      %p228 = scmp.ne.s32.totalorder %s213, %s227
      %p229 = scmp.eq.s32.totalorder %s35, 0
      %p230 = por %p228, %p229
      %s231 = ssub.s32 %s29, %s36
      %p232 = scmp.eq.s32.totalorder %s231, 0
      %s234 = sadd.s32 %s233, 1
      %s235 = scalar_select %p232, %s233, %s234
      %p238 = pneg %p232
      %p239 = scmp.eq.s32.totalorder %s29, 1
      %p240 = por %p238, %p239
      %p241 = scmp.ne.s32.totalorder %s233, %s236
      %p242 = scmp.eq.s32.totalorder %s29, 0
      %p243 = por %p241, %p242
      %p244 = scmp.ne.s32.totalorder %s233, %s236
      %p245 = scmp.eq.s32.totalorder %s34, 1
      %p246 = por %p244, %p245
      %p247 = scmp.ne.s32.totalorder %s236, %s237
      %p248 = scmp.eq.s32.totalorder %s34, 0
      %p249 = por %p247, %p248
      %p250 = scmp.ne.s32.totalorder %s236, %s237
      %p251 = scmp.eq.s32.totalorder %s35, 1
      %p252 = por %p250, %p251
      %p254 = scmp.ne.s32.totalorder %s237, %s253
      %p255 = scmp.eq.s32.totalorder %s35, 0
      %p256 = por %p254, %p255
      %s257 = ssub.s32 %s29, %s36
      %p258 = scmp.eq.s32.totalorder %s257, 0
      %s260 = sadd.s32 %s259, 1
      %s261 = scalar_select %p258, %s259, %s260
      %p264 = pneg %p258
      %p265 = scmp.eq.s32.totalorder %s29, 1
      %p266 = por %p264, %p265
      %p267 = scmp.ne.s32.totalorder %s259, %s262
      %p268 = scmp.eq.s32.totalorder %s29, 0
      %p269 = por %p267, %p268
      %p270 = scmp.ne.s32.totalorder %s259, %s262
      %p271 = scmp.eq.s32.totalorder %s34, 1
      %p272 = por %p270, %p271
      %p273 = scmp.ne.s32.totalorder %s262, %s263
      %p274 = scmp.eq.s32.totalorder %s34, 0
      %p275 = por %p273, %p274
      %p276 = scmp.ne.s32.totalorder %s262, %s263
      %p277 = scmp.eq.s32.totalorder %s35, 1
      %p278 = por %p276, %p277
      %p280 = scmp.ne.s32.totalorder %s263, %s279
      %p281 = scmp.eq.s32.totalorder %s35, 0
      %p282 = por %p280, %p281
      %p283 = scmp.le.s32.totalorder 1, %s29
      %p284 = scmp.lt.s32.totalorder %s29, 3
      %p285 = pnand %p283, %p284
      %p286 = pneg %p285
      // Predicated region
      $region9: #{embedding_to_resnet1d_masking.1} parent=5 // pred_check
        _
      $region10: #{embedding_to_resnet1d_masking.1} parent=5 // pred_check_branch
        %288 = sbr.rel (%p285) target = $region12
      $region11: #{embedding_to_resnet1d_masking.1} parent=5 // pred_region
        %s289 = ssub.s32 %s29, 1
        // Predicated region
        $region13: #{embedding_to_resnet1d_masking.1} parent=11 // pred_check
          %p290 = pneg %p76
        $region14: #{embedding_to_resnet1d_masking.1} parent=11 // pred_check_branch
          %292 = sbr.rel (%p290) target = $region16
        $region15: #{embedding_to_resnet1d_masking.1} parent=11 // pred_region
          %294 = vsyncadd [#allocation6], 0
          %s295 = sshll.u32 %s1, 4
          %s296 = int_to_ptr.hbm [resolvable:$true] %s295
          %s297 = sshll.u32 [#allocation5], 4
          %s298 = int_to_ptr.vmem [resolvable:$true] %s297
          %303 = dma.hbm_to_vmem [thread:$0]  %s296, 6208, %s298, [#allocation6], 64, 64, 4
        $region16: #{embedding_to_resnet1d_masking.1} parent=11 // pred_fallthru
          _
        // Predicated region
        $region17: #{embedding_to_resnet1d_masking.1} parent=11 // pred_check
          %p304 = pneg %p97
        $region18: #{embedding_to_resnet1d_masking.1} parent=11 // pred_check_branch
          %306 = sbr.rel (%p304) target = $region20
        $region19: #{embedding_to_resnet1d_masking.1} parent=11 // pred_region
          _
        $region20: #{embedding_to_resnet1d_masking.1} parent=11 // pred_fallthru
          _
        // Predicated region
        $region21: #{embedding_to_resnet1d_masking.1} parent=11 // pred_check
          %p307 = pneg %p118
        $region22: #{embedding_to_resnet1d_masking.1} parent=11 // pred_check_branch
          %309 = sbr.rel (%p307) target = $region24
        $region23: #{embedding_to_resnet1d_masking.1} parent=11 // pred_region
          %311 = vsyncadd [#allocation6], 0
          %s312 = sshll.u32 %s3, 4
          %s313 = int_to_ptr.hbm [resolvable:$true] %s312
          %s314 = sshll.u32 [#allocation7], 4
          %s315 = int_to_ptr.vmem [resolvable:$true] %s314
          %320 = dma.hbm_to_vmem [thread:$0]  %s313, 1536, %s315, [#allocation6], 64, 64, 4
        $region24: #{embedding_to_resnet1d_masking.1} parent=11 // pred_fallthru
          _
        // Predicated region
        $region25: #{embedding_to_resnet1d_masking.1} parent=11 // pred_check
          %p321 = pneg %p139
        $region26: #{embedding_to_resnet1d_masking.1} parent=11 // pred_check_branch
          %323 = sbr.rel (%p321) target = $region28
        $region27: #{embedding_to_resnet1d_masking.1} parent=11 // pred_region
          _
        $region28: #{embedding_to_resnet1d_masking.1} parent=11 // pred_fallthru
          _
        // Predicated region
        $region29: #{embedding_to_resnet1d_masking.1} parent=11 // pred_check
          %p324 = pneg %p160
        $region30: #{embedding_to_resnet1d_masking.1} parent=11 // pred_check_branch
          %326 = sbr.rel (%p324) target = $region32
        $region31: #{embedding_to_resnet1d_masking.1} parent=11 // pred_region
          %328 = vsyncadd [#allocation9], 0
          %s329 = sshll.u32 %s5, 4
          %s330 = int_to_ptr.hbm [resolvable:$true] %s329
          %s331 = sshll.u32 [#allocation8], 4
          %s332 = int_to_ptr.vmem [resolvable:$true] %s331
          %337 = dma.hbm_to_vmem [thread:$0]  %s330, 1536, %s332, [#allocation9], 64, 64, 4
        $region32: #{embedding_to_resnet1d_masking.1} parent=11 // pred_fallthru
          _
        // Predicated region
        $region33: #{embedding_to_resnet1d_masking.1} parent=11 // pred_check
          %p338 = pneg %p181
        $region34: #{embedding_to_resnet1d_masking.1} parent=11 // pred_check_branch
          %340 = sbr.rel (%p338) target = $region36
        $region35: #{embedding_to_resnet1d_masking.1} parent=11 // pred_region
          %342 = vsyncadd [#allocation9], 0
          %s343 = sshll.u32 %s6, 4
          %s344 = int_to_ptr.hbm [resolvable:$true] %s343
          %s345 = sshll.u32 [#allocation10], 4
          %s346 = int_to_ptr.vmem [resolvable:$true] %s345
          %351 = dma.hbm_to_vmem [thread:$0]  %s344, 32, %s346, [#allocation9], 16, 16, 1
        $region36: #{embedding_to_resnet1d_masking.1} parent=11 // pred_fallthru
          _
        // Predicated region
        $region37: #{embedding_to_resnet1d_masking.1} parent=11 // pred_check
          %p352 = pneg %p202
        $region38: #{embedding_to_resnet1d_masking.1} parent=11 // pred_check_branch
          %354 = sbr.rel (%p352) target = $region40
        $region39: #{embedding_to_resnet1d_masking.1} parent=11 // pred_region
          %356 = vsyncadd [#allocation12], 0
          %s357 = sshll.u32 %s7, 4
          %s358 = int_to_ptr.hbm [resolvable:$true] %s357
          %s359 = sshll.u32 [#allocation11], 4
          %s360 = int_to_ptr.vmem [resolvable:$true] %s359
          %365 = dma.hbm_to_vmem [thread:$0]  %s358, 256, %s360, [#allocation12], 64, 64, 4
        $region40: #{embedding_to_resnet1d_masking.1} parent=11 // pred_fallthru
          _
        // Predicated region
        $region41: #{embedding_to_resnet1d_masking.1} parent=11 // pred_check
          %p366 = pneg %p223
        $region42: #{embedding_to_resnet1d_masking.1} parent=11 // pred_check_branch
          %368 = sbr.rel (%p366) target = $region44
        $region43: #{embedding_to_resnet1d_masking.1} parent=11 // pred_region
          %370 = vsyncadd [#allocation12], 0
          %s372 = sshll.u32 %s8, 4
          %s373 = int_to_ptr.hbm [resolvable:$true] %s372
          %s374 = sshll.u32 [#allocation13], 4
          %s375 = int_to_ptr.vmem [resolvable:$true] %s374
          %377 = dma.hbm_to_vmem [thread:$0]  %s373, 16, %s375, [#allocation12]
        $region44: #{embedding_to_resnet1d_masking.1} parent=11 // pred_fallthru
          _
      $region12: #{embedding_to_resnet1d_masking.1} parent=5 // pred_fallthru
        _
      %p378 = scmp.lt.s32.totalorder %s29, 2
      // Predicated region
      $region45: #{embedding_to_resnet1d_masking.1} parent=5 // pred_check
        %p379 = pneg %p378
      $region46: #{embedding_to_resnet1d_masking.1} parent=5 // pred_check_branch
        %381 = sbr.rel (%p379) target = $region48
      $region47: #{embedding_to_resnet1d_masking.1} parent=5 // pred_region
        // Predicated region
        $region49: #{embedding_to_resnet1d_masking.1} parent=47 // pred_check
          %p382 = pneg %p49
        $region50: #{embedding_to_resnet1d_masking.1} parent=47 // pred_check_branch
          %384 = sbr.rel (%p382) target = $region52
        $region51: #{embedding_to_resnet1d_masking.1} parent=47 // pred_region
          %s385 = sand.u32 %s39, 1
          %s386 = scalar_lea.sflag [#allocation3], %s385
          %s387 = sand.u32 %s39, 1
          %s388 = scalar_lea.vmem [#allocation2], %s387
          %390 = vsyncadd %s386, 0
          %s391 = scalar_lea.hbm %s0, %s29
          %s393 = sshll.u32 %s391, 4
          %s394 = int_to_ptr.hbm [resolvable:$true] %s393
          %s395 = sshll.u32 %s388, 4
          %s396 = int_to_ptr.vmem [resolvable:$true] %s395
          %398 = dma.hbm_to_vmem [thread:$0]  %s394, 16, %s396, %s386
        $region52: #{embedding_to_resnet1d_masking.1} parent=47 // pred_fallthru
          _
      $region48: #{embedding_to_resnet1d_masking.1} parent=5 // pred_fallthru
        _
      %p399 = scmp.le.s32.totalorder 1, %s29
      %p400 = scmp.lt.s32.totalorder %s29, 3
      %p401 = pnand %p399, %p400
      %p402 = pneg %p401
      // Predicated region
      $region53: #{embedding_to_resnet1d_masking.1} parent=5 // pred_check
        _
      $region54: #{embedding_to_resnet1d_masking.1} parent=5 // pred_check_branch
        %404 = sbr.rel (%p401) target = $region56
      $region55: #{embedding_to_resnet1d_masking.1} parent=5 // pred_region
        %s405 = ssub.s32 %s29, 1
        %s406 = sand.u32 %s42, 1
        %s407 = scalar_lea.sflag [#allocation3], %s406
        %s408 = sand.u32 %s42, 1
        %s409 = scalar_lea.vmem [#allocation2], %s408
        // Predicated region
        $region57: #{embedding_to_resnet1d_masking.1} parent=55 // pred_check
          %p410 = pneg %p55
        $region58: #{embedding_to_resnet1d_masking.1} parent=55 // pred_check_branch
          %412 = sbr.rel (%p410) target = $region60
        $region59: #{embedding_to_resnet1d_masking.1} parent=55 // pred_region
          %414 = dma.done %s407, 16
        $region60: #{embedding_to_resnet1d_masking.1} parent=55 // pred_fallthru
          _
        // Predicated region
        $region61: #{embedding_to_resnet1d_masking.1} parent=55 // pred_check
          %p415 = pneg %p76
        $region62: #{embedding_to_resnet1d_masking.1} parent=55 // pred_check_branch
          %417 = sbr.rel (%p415) target = $region64
        $region63: #{embedding_to_resnet1d_masking.1} parent=55 // pred_region
          %419 = dma.done [#allocation6], 6208
        $region64: #{embedding_to_resnet1d_masking.1} parent=55 // pred_fallthru
          _
        // Predicated region
        $region65: #{embedding_to_resnet1d_masking.1} parent=55 // pred_check
          %p420 = pneg %p118
        $region66: #{embedding_to_resnet1d_masking.1} parent=55 // pred_check_branch
          %422 = sbr.rel (%p420) target = $region68
        $region67: #{embedding_to_resnet1d_masking.1} parent=55 // pred_region
          %424 = dma.done [#allocation6], 1536
        $region68: #{embedding_to_resnet1d_masking.1} parent=55 // pred_fallthru
          _
        // Predicated region
        $region69: #{embedding_to_resnet1d_masking.1} parent=55 // pred_check
          %p425 = pneg %p160
        $region70: #{embedding_to_resnet1d_masking.1} parent=55 // pred_check_branch
          %427 = sbr.rel (%p425) target = $region72
        $region71: #{embedding_to_resnet1d_masking.1} parent=55 // pred_region
          %429 = dma.done [#allocation9], 1536
        $region72: #{embedding_to_resnet1d_masking.1} parent=55 // pred_fallthru
          _
        // Predicated region
        $region73: #{embedding_to_resnet1d_masking.1} parent=55 // pred_check
          %p430 = pneg %p181
        $region74: #{embedding_to_resnet1d_masking.1} parent=55 // pred_check_branch
          %432 = sbr.rel (%p430) target = $region76
        $region75: #{embedding_to_resnet1d_masking.1} parent=55 // pred_region
          %434 = dma.done [#allocation9], 32
        $region76: #{embedding_to_resnet1d_masking.1} parent=55 // pred_fallthru
          _
        // Predicated region
        $region77: #{embedding_to_resnet1d_masking.1} parent=55 // pred_check
          %p435 = pneg %p202
        $region78: #{embedding_to_resnet1d_masking.1} parent=55 // pred_check_branch
          %437 = sbr.rel (%p435) target = $region80
        $region79: #{embedding_to_resnet1d_masking.1} parent=55 // pred_region
          %439 = dma.done [#allocation12], 256
        $region80: #{embedding_to_resnet1d_masking.1} parent=55 // pred_fallthru
          _
        // Predicated region
        $region81: #{embedding_to_resnet1d_masking.1} parent=55 // pred_check
          %p440 = pneg %p223
        $region82: #{embedding_to_resnet1d_masking.1} parent=55 // pred_check_branch
          %442 = sbr.rel (%p440) target = $region84
        $region83: #{embedding_to_resnet1d_masking.1} parent=55 // pred_region
          %444 = dma.done [#allocation12], 16
        $region84: #{embedding_to_resnet1d_masking.1} parent=55 // pred_fallthru
          _
        %s445 = sand.u32 %s42, 1
        %s446 = scalar_lea.sflag [#allocation3], %s445
        %s447 = sand.u32 %s42, 1
        %s448 = scalar_lea.vmem [#allocation2], %s447
        %p449 = pneg %p55
        %p450 = pneg %p52
        %p451 = pneg %p76
        %p452 = pneg %p73
        %p453 = pneg %p97
        %p454 = pneg %p94
        %p455 = pneg %p118
        %p456 = pneg %p115
        %p457 = pneg %p139
        %p458 = pneg %p136
        %p459 = pneg %p160
        %p460 = pneg %p157
        %p461 = pneg %p181
        %p462 = pneg %p178
        %p463 = pneg %p202
        %p464 = pneg %p199
        %p465 = pneg %p223
        %p466 = pneg %p220
        %p467 = pneg %p249
        %p468 = pneg %p246
        %s469 = sand.u32 %s236, 1
        %s470 = scalar_lea.sflag [#allocation4], %s469
        %s471 = sand.u32 %s236, 1
        %s472 = scalar_lea.vmem [#allocation14], %s471
        %p473 = pneg %p275
        %p474 = pneg %p272
        %s475 = sand.u32 %s262, 1
        %s476 = scalar_lea.sflag [#allocation16], %s475
        %s477 = sand.u32 %s262, 1
        %s478 = scalar_lea.vmem [#allocation15], %s477
        %v480 = vld [vmem:[%s409] sm:$0x1]
        %v481 = vlaneseq
        %v482 = vand.u32 %v481, 127
        %v483 = vadd.s32 %v482, 128
        %v484 = vadd.s32 %v482, 256
        %v485 = vperm.slane %v480, 0
        %v486 = vlaneseq
        %v487 = vshrl.u32 %v486, 7
        %489 = vset.pattern.permute.xlu0 %v487
        %490 = vperm.xlu0 %489, %v485
        %v491 = vpop.permute.xlu0 %490
        %vm492 = vcmp.eq.s32.totalorder %v491, %v482
        %vm493 = vcmp.eq.s32.totalorder %v491, %v483
        %vm494 = vcmp.eq.s32.totalorder %v491, %v484
        %v495 = vsel %vm492, 1, 0
        %v496 = vsel %vm493, 1, 0
        %v497 = vsel %vm494, 1, 0
        %v498 = vcvt.s32.f32 %v495
        %v499 = vcvt.s32.f32 %v496
        %v500 = vcvt.s32.f32 %v497
        %v501 = vpack.c.bf16 %v499, %v498
        %v502 = vpack.c.bf16 %v500, %v500
        %v505 = vunpack.c.l.b16 %v501
        %v506 = vunpack.c.h.b16 %v501
        %v507 = vunpack.c.l.b16 %v502
        %v508 = vpack.c.b16 %v505, %v505
        %v509 = vpack.c.b16 %v506, %v506
        %v510 = vpack.c.b16 %v507, %v507
        %v512 = vshrl.u32 %v508, 16
        %v514 = vrot.slane %v512, 7
        %v515 = vshll.u32 %v508, 16
        %v517 = vor.u32 %v514, %v515
        %v519 = vshrl.u32 %v509, 16
        %v521 = vrot.slane %v519, 7
        %v522 = vshll.u32 %v509, 16
        %v524 = vor.u32 %v521, %v522
        %v526 = vshrl.u32 %v510, 16
        %v528 = vrot.slane %v526, 7
        %v529 = vshll.u32 %v510, 16
        %v531 = vor.u32 %v528, %v529
        %vm535 = vcmask 1040384
        %vm536 = vsmask.f32 256
        %vm537 = vmand %vm535, %vm536
        %v538 = vsel %vm537, 0, %v517
        %v539 = vsel %vm537, 0, %v524
        %v540 = vsel %vm537, 0, %v531
        %vm541 = vcmask 1044480
        %vm542 = vsmask.f32 4352
        %vm543 = vmand %vm541, %vm542
        %v544 = vsel %vm543, %v538, 0
        %v545 = vsel %vm543, %v539, 0
        %v546 = vsel %vm543, %v540, 0
        %v548 = vshrl.u32 %v544, 16
        %v550 = vshll.u32 %v544, 16
        %v552 = vrot.slane %v550, 1
        %v553 = vor.u32 %v548, %v552
        %v555 = vshrl.u32 %v545, 16
        %v557 = vshll.u32 %v545, 16
        %v559 = vrot.slane %v557, 1
        %v560 = vor.u32 %v555, %v559
        %v562 = vshrl.u32 %v546, 16
        %v564 = vshll.u32 %v546, 16
        %v566 = vrot.slane %v564, 1
        %v567 = vor.u32 %v562, %v566
        %568 = vrot.lane.b32.xlu0 %v553, 1
        %v569 = vpop.permute.xlu0 %568
        %570 = vrot.lane.b32.xlu0 %v560, 1
        %v571 = vpop.permute.xlu0 %570
        %572 = vrot.lane.b32.xlu0 %v567, 1
        %v573 = vpop.permute.xlu0 %572
        %vm574 = vcmask 7168
        %v575 = vsel %vm574, %v569, %v571
        %v576 = vsel %vm574, %v571, %v573
        %v581 = vrot.slane %v544, 1
        %v582 = vrot.slane %v545, 1
        %v583 = vrot.slane %v546, 1
        %584 = vrot.lane.b32.xlu0 %v581, 2
        %v585 = vpop.permute.xlu0 %584
        %586 = vrot.lane.b32.xlu0 %v582, 2
        %v587 = vpop.permute.xlu0 %586
        %588 = vrot.lane.b32.xlu0 %v583, 2
        %v589 = vpop.permute.xlu0 %588
        %vm590 = vcmask 15360
        %v591 = vsel %vm590, %v585, %v587
        %v592 = vsel %vm590, %v587, %v589
        %vm594 = vcmask 7168
        %v596 = vsel %vm594, %v546, %v569
        %vm598 = vcmask 15360
        %v601 = vsel %vm598, %v576, %v585
        %v603 = vld [vmem:[#allocation5] sm:$0xf]
        %v604 = vld [vmem:[#allocation5 + $0x4] sm:$0xf]
        %v605 = vld [vmem:[#allocation5 + $0x8] sm:$0xf]
        %v606 = vld [vmem:[#allocation5 + $0xc] sm:$0xf]
        %v607 = vld [vmem:[#allocation5 + $0x10] sm:$0xf]
        %v608 = vld [vmem:[#allocation5 + $0x14] sm:$0xf]
        %v609 = vld [vmem:[#allocation5 + $0x18] sm:$0xf]
        %v610 = vld [vmem:[#allocation5 + $0x1c] sm:$0xf]
        %v611 = vld [vmem:[#allocation5 + $0x20] sm:$0xf]
        %v612 = vld [vmem:[#allocation5 + $0x24] sm:$0xf]
        %v613 = vld [vmem:[#allocation5 + $0x28] sm:$0xf]
        %v614 = vld [vmem:[#allocation5 + $0x2c] sm:$0xf]
        %v615 = vld [vmem:[#allocation5 + $0x30] sm:$0xf]
        %v616 = vld [vmem:[#allocation5 + $0x34] sm:$0xf]
        %v617 = vld [vmem:[#allocation5 + $0x38] sm:$0xf]
        %v618 = vld [vmem:[#allocation5 + $0x3c] sm:$0xf]
        %v619 = vld [vmem:[#allocation5 + $0x40] sm:$0xf]
        %v620 = vld [vmem:[#allocation5 + $0x44] sm:$0xf]
        %v621 = vld [vmem:[#allocation5 + $0x48] sm:$0xf]
        %v622 = vld [vmem:[#allocation5 + $0x4c] sm:$0xf]
        %v623 = vld [vmem:[#allocation5 + $0x50] sm:$0xf]
        %v624 = vld [vmem:[#allocation5 + $0x54] sm:$0xf]
        %v625 = vld [vmem:[#allocation5 + $0x58] sm:$0xf]
        %v626 = vld [vmem:[#allocation5 + $0x5c] sm:$0xf]
        %v627 = vld [vmem:[#allocation5 + $0x60] sm:$0xf]
        %v628 = vld [vmem:[#allocation5 + $0x64] sm:$0xf]
        %v629 = vld [vmem:[#allocation5 + $0x68] sm:$0xf]
        %v630 = vld [vmem:[#allocation5 + $0x6c] sm:$0xf]
        %v631 = vld [vmem:[#allocation5 + $0x70] sm:$0xf]
        %v632 = vld [vmem:[#allocation5 + $0x74] sm:$0xf]
        %v633 = vld [vmem:[#allocation5 + $0x78] sm:$0xf]
        %v634 = vld [vmem:[#allocation5 + $0x7c] sm:$0xf]
        %v635 = vld [vmem:[#allocation5 + $0x80] sm:$0xf]
        %v636 = vld [vmem:[#allocation5 + $0x84] sm:$0xf]
        %v637 = vld [vmem:[#allocation5 + $0x88] sm:$0xf]
        %v638 = vld [vmem:[#allocation5 + $0x8c] sm:$0xf]
        %v639 = vld [vmem:[#allocation5 + $0x90] sm:$0xf]
        %v640 = vld [vmem:[#allocation5 + $0x94] sm:$0xf]
        %v641 = vld [vmem:[#allocation5 + $0x98] sm:$0xf]
        %v642 = vld [vmem:[#allocation5 + $0x9c] sm:$0xf]
        %v643 = vld [vmem:[#allocation5 + $0xa0] sm:$0xf]
        %v644 = vld [vmem:[#allocation5 + $0xa4] sm:$0xf]
        %v645 = vld [vmem:[#allocation5 + $0xa8] sm:$0xf]
        %v646 = vld [vmem:[#allocation5 + $0xac] sm:$0xf]
        %v647 = vld [vmem:[#allocation5 + $0xb0] sm:$0xf]
        %v648 = vld [vmem:[#allocation5 + $0xb4] sm:$0xf]
        %v649 = vld [vmem:[#allocation5 + $0xb8] sm:$0xf]
        %v650 = vld [vmem:[#allocation5 + $0xbc] sm:$0xf]
        %v651 = vld [vmem:[#allocation5 + $0xc0] sm:$0xf]
        %v652 = vld [vmem:[#allocation5 + $0xc4] sm:$0xf]
        %v653 = vld [vmem:[#allocation5 + $0xc8] sm:$0xf]
        %v654 = vld [vmem:[#allocation5 + $0xcc] sm:$0xf]
        %v655 = vld [vmem:[#allocation5 + $0xd0] sm:$0xf]
        %v656 = vld [vmem:[#allocation5 + $0xd4] sm:$0xf]
        %v657 = vld [vmem:[#allocation5 + $0xd8] sm:$0xf]
        %v658 = vld [vmem:[#allocation5 + $0xdc] sm:$0xf]
        %v659 = vld [vmem:[#allocation5 + $0xe0] sm:$0xf]
        %v660 = vld [vmem:[#allocation5 + $0xe4] sm:$0xf]
        %v661 = vld [vmem:[#allocation5 + $0xe8] sm:$0xf]
        %v662 = vld [vmem:[#allocation5 + $0xec] sm:$0xf]
        %v663 = vld [vmem:[#allocation5 + $0xf0] sm:$0xf]
        %v664 = vld [vmem:[#allocation5 + $0xf4] sm:$0xf]
        %v665 = vld [vmem:[#allocation5 + $0xf8] sm:$0xf]
        %v666 = vld [vmem:[#allocation5 + $0xfc] sm:$0xf]
        %v667 = vld [vmem:[#allocation5 + $0x100] sm:$0xf]
        %v668 = vld [vmem:[#allocation5 + $0x104] sm:$0xf]
        %v669 = vld [vmem:[#allocation5 + $0x108] sm:$0xf]
        %v670 = vld [vmem:[#allocation5 + $0x10c] sm:$0xf]
        %v671 = vld [vmem:[#allocation5 + $0x110] sm:$0xf]
        %v672 = vld [vmem:[#allocation5 + $0x114] sm:$0xf]
        %v673 = vld [vmem:[#allocation5 + $0x118] sm:$0xf]
        %v674 = vld [vmem:[#allocation5 + $0x11c] sm:$0xf]
        %v675 = vld [vmem:[#allocation5 + $0x120] sm:$0xf]
        %v676 = vld [vmem:[#allocation5 + $0x124] sm:$0xf]
        %v677 = vld [vmem:[#allocation5 + $0x128] sm:$0xf]
        %v678 = vld [vmem:[#allocation5 + $0x12c] sm:$0xf]
        %v679 = vld [vmem:[#allocation5 + $0x130] sm:$0xf]
        %v680 = vld [vmem:[#allocation5 + $0x134] sm:$0xf]
        %v681 = vld [vmem:[#allocation5 + $0x138] sm:$0xf]
        %v682 = vld [vmem:[#allocation5 + $0x13c] sm:$0xf]
        %v683 = vld [vmem:[#allocation5 + $0x140] sm:$0xf]
        %v684 = vld [vmem:[#allocation5 + $0x144] sm:$0xf]
        %v685 = vld [vmem:[#allocation5 + $0x148] sm:$0xf]
        %v686 = vld [vmem:[#allocation5 + $0x14c] sm:$0xf]
        %v687 = vld [vmem:[#allocation5 + $0x150] sm:$0xf]
        %v688 = vld [vmem:[#allocation5 + $0x154] sm:$0xf]
        %v689 = vld [vmem:[#allocation5 + $0x158] sm:$0xf]
        %v690 = vld [vmem:[#allocation5 + $0x15c] sm:$0xf]
        %v691 = vld [vmem:[#allocation5 + $0x160] sm:$0xf]
        %v692 = vld [vmem:[#allocation5 + $0x164] sm:$0xf]
        %v693 = vld [vmem:[#allocation5 + $0x168] sm:$0xf]
        %v694 = vld [vmem:[#allocation5 + $0x16c] sm:$0xf]
        %v695 = vld [vmem:[#allocation5 + $0x170] sm:$0xf]
        %v696 = vld [vmem:[#allocation5 + $0x174] sm:$0xf]
        %v697 = vld [vmem:[#allocation5 + $0x178] sm:$0xf]
        %v698 = vld [vmem:[#allocation5 + $0x17c] sm:$0xf]
        %v699 = vld [vmem:[#allocation5 + $0x180] sm:$0x3]
        %v700 = vld [vmem:[%s2] sm:$0x1]
        %v702 = vperm.slane %v700, 0
        %v801 = vunpack.c.l.b16 %v603
        %v802 = vunpack.c.l.b16 %v604
        %v803 = vunpack.c.l.b16 %v605
        %v804 = vunpack.c.l.b16 %v606
        %v805 = vunpack.c.l.b16 %v607
        %v806 = vunpack.c.l.b16 %v608
        %v807 = vunpack.c.l.b16 %v609
        %v808 = vunpack.c.l.b16 %v610
        %v809 = vunpack.c.l.b16 %v611
        %v810 = vunpack.c.l.b16 %v612
        %v811 = vunpack.c.l.b16 %v613
        %v812 = vunpack.c.l.b16 %v614
        %v813 = vunpack.c.l.b16 %v615
        %v814 = vunpack.c.l.b16 %v616
        %v815 = vunpack.c.l.b16 %v617
        %v816 = vunpack.c.l.b16 %v618
        %v817 = vunpack.c.l.b16 %v619
        %v818 = vunpack.c.l.b16 %v620
        %v819 = vunpack.c.l.b16 %v621
        %v820 = vunpack.c.l.b16 %v622
        %v821 = vunpack.c.l.b16 %v623
        %v822 = vunpack.c.l.b16 %v624
        %v823 = vunpack.c.l.b16 %v625
        %v824 = vunpack.c.l.b16 %v626
        %v825 = vunpack.c.l.b16 %v627
        %v826 = vunpack.c.l.b16 %v628
        %v827 = vunpack.c.l.b16 %v629
        %v828 = vunpack.c.l.b16 %v630
        %v829 = vunpack.c.l.b16 %v631
        %v830 = vunpack.c.l.b16 %v632
        %v831 = vunpack.c.l.b16 %v633
        %v832 = vunpack.c.l.b16 %v634
        %v833 = vunpack.c.l.b16 %v635
        %v834 = vunpack.c.l.b16 %v636
        %v835 = vunpack.c.l.b16 %v637
        %v836 = vunpack.c.l.b16 %v638
        %v837 = vunpack.c.l.b16 %v639
        %v838 = vunpack.c.l.b16 %v640
        %v839 = vunpack.c.l.b16 %v641
        %v840 = vunpack.c.l.b16 %v642
        %v841 = vunpack.c.l.b16 %v643
        %v842 = vunpack.c.l.b16 %v644
        %v843 = vunpack.c.l.b16 %v645
        %v844 = vunpack.c.l.b16 %v646
        %v845 = vunpack.c.l.b16 %v647
        %v846 = vunpack.c.l.b16 %v648
        %v847 = vunpack.c.l.b16 %v649
        %v848 = vunpack.c.l.b16 %v650
        %v849 = vunpack.c.l.b16 %v651
        %v850 = vunpack.c.l.b16 %v652
        %v851 = vunpack.c.l.b16 %v653
        %v852 = vunpack.c.l.b16 %v654
        %v853 = vunpack.c.l.b16 %v655
        %v854 = vunpack.c.l.b16 %v656
        %v855 = vunpack.c.l.b16 %v657
        %v856 = vunpack.c.l.b16 %v658
        %v857 = vunpack.c.l.b16 %v659
        %v858 = vunpack.c.l.b16 %v660
        %v859 = vunpack.c.l.b16 %v661
        %v860 = vunpack.c.l.b16 %v662
        %v861 = vunpack.c.l.b16 %v663
        %v862 = vunpack.c.l.b16 %v664
        %v863 = vunpack.c.l.b16 %v665
        %v864 = vunpack.c.l.b16 %v666
        %v865 = vunpack.c.l.b16 %v667
        %v866 = vunpack.c.l.b16 %v668
        %v867 = vunpack.c.l.b16 %v669
        %v868 = vunpack.c.l.b16 %v670
        %v869 = vunpack.c.l.b16 %v671
        %v870 = vunpack.c.l.b16 %v672
        %v871 = vunpack.c.l.b16 %v673
        %v872 = vunpack.c.l.b16 %v674
        %v873 = vunpack.c.l.b16 %v675
        %v874 = vunpack.c.l.b16 %v676
        %v875 = vunpack.c.l.b16 %v677
        %v876 = vunpack.c.l.b16 %v678
        %v877 = vunpack.c.l.b16 %v679
        %v878 = vunpack.c.l.b16 %v680
        %v879 = vunpack.c.l.b16 %v681
        %v880 = vunpack.c.l.b16 %v682
        %v881 = vunpack.c.l.b16 %v683
        %v882 = vunpack.c.l.b16 %v684
        %v883 = vunpack.c.l.b16 %v685
        %v884 = vunpack.c.l.b16 %v686
        %v885 = vunpack.c.l.b16 %v687
        %v886 = vunpack.c.l.b16 %v688
        %v887 = vunpack.c.l.b16 %v689
        %v888 = vunpack.c.l.b16 %v690
        %v889 = vunpack.c.l.b16 %v691
        %v890 = vunpack.c.l.b16 %v692
        %v891 = vunpack.c.l.b16 %v693
        %v892 = vunpack.c.l.b16 %v694
        %v893 = vunpack.c.l.b16 %v695
        %v894 = vunpack.c.l.b16 %v696
        %v895 = vunpack.c.l.b16 %v697
        %v896 = vunpack.c.l.b16 %v698
        %v897 = vunpack.c.l.b16 %v699
        %v898 = vpack.c.b16 %v802, %v801
        %v899 = vpack.c.b16 %v804, %v803
        %v900 = vpack.c.b16 %v806, %v805
        %v901 = vpack.c.b16 %v808, %v807
        %v902 = vpack.c.b16 %v810, %v809
        %v903 = vpack.c.b16 %v812, %v811
        %v904 = vpack.c.b16 %v814, %v813
        %v905 = vpack.c.b16 %v816, %v815
        %v906 = vpack.c.b16 %v818, %v817
        %v907 = vpack.c.b16 %v820, %v819
        %v908 = vpack.c.b16 %v822, %v821
        %v909 = vpack.c.b16 %v824, %v823
        %v910 = vpack.c.b16 %v826, %v825
        %v911 = vpack.c.b16 %v828, %v827
        %v912 = vpack.c.b16 %v830, %v829
        %v913 = vpack.c.b16 %v832, %v831
        %v914 = vpack.c.b16 %v834, %v833
        %v915 = vpack.c.b16 %v836, %v835
        %v916 = vpack.c.b16 %v838, %v837
        %v917 = vpack.c.b16 %v840, %v839
        %v918 = vpack.c.b16 %v842, %v841
        %v919 = vpack.c.b16 %v844, %v843
        %v920 = vpack.c.b16 %v846, %v845
        %v921 = vpack.c.b16 %v848, %v847
        %v922 = vpack.c.b16 %v850, %v849
        %v923 = vpack.c.b16 %v852, %v851
        %v924 = vpack.c.b16 %v854, %v853
        %v925 = vpack.c.b16 %v856, %v855
        %v926 = vpack.c.b16 %v858, %v857
        %v927 = vpack.c.b16 %v860, %v859
        %v928 = vpack.c.b16 %v862, %v861
        %v929 = vpack.c.b16 %v864, %v863
        %v930 = vpack.c.b16 %v866, %v865
        %v931 = vpack.c.b16 %v868, %v867
        %v932 = vpack.c.b16 %v870, %v869
        %v933 = vpack.c.b16 %v872, %v871
        %v934 = vpack.c.b16 %v874, %v873
        %v935 = vpack.c.b16 %v876, %v875
        %v936 = vpack.c.b16 %v878, %v877
        %v937 = vpack.c.b16 %v880, %v879
        %v938 = vpack.c.b16 %v882, %v881
        %v939 = vpack.c.b16 %v884, %v883
        %v940 = vpack.c.b16 %v886, %v885
        %v941 = vpack.c.b16 %v888, %v887
        %v942 = vpack.c.b16 %v890, %v889
        %v943 = vpack.c.b16 %v892, %v891
        %v944 = vpack.c.b16 %v894, %v893
        %v945 = vpack.c.b16 %v896, %v895
        %v946 = vpack.c.b16 %v897, %v897
        %vm995 = vcmask 23552
        %v997 = vsel %vm995, %v592, 0
        %vm999 = vcmask 1040384
        %vm1000 = vcmask 1041408
        %v1001 = vsel %vm999, 4294967295, 65535
        %v1002 = vsel %vm1000, %v1001, 0
        %v1004 = vand.u32 %v946, %v1002
        %1006 = vmatpush.bf16.msra.mxu0 %v905
        %1007 = vmatpush.bf16.msra.mxu0 %v904
        %1008 = vmatpush.bf16.msra.mxu0 %v903
        %1009 = vmatpush.bf16.msra.mxu0 %v902
        %1010 = vmatpush.bf16.msra.mxu0 %v901
        %1011 = vmatpush.bf16.msra.mxu0 %v900
        %1012 = vmatpush.bf16.msra.mxu0 %v899
        %1013 = vmatpush.bf16.msra.mxu0 %v898
        %1014 = vmatmul.bf16.gmra.mxu0 %v544
        %v1015 = vpop.f32.mrf.mxu0
        %v1016 = vadd.f32 %v702, %v1015
        %v1017 = vpop.f32.mrf.mxu0
        %1018 = vdwg.mxu0
        %1019 = vmatpush.bf16.msra.mxu0 %v913
        %1020 = vmatpush.bf16.msra.mxu0 %v912
        %1021 = vmatpush.bf16.msra.mxu0 %v911
        %1022 = vmatpush.bf16.msra.mxu0 %v910
        %1023 = vmatpush.bf16.msra.mxu0 %v909
        %1024 = vmatpush.bf16.msra.mxu0 %v908
        %1025 = vmatpush.bf16.msra.mxu0 %v907
        %1026 = vmatpush.bf16.msra.mxu0 %v906
        %1027 = vmatmul.bf16.gmra.mxu0 %v545
        %v1028 = vpop.f32.mrf.mxu0
        %v1029 = vadd.f32 %v1016, %v1028
        %v1030 = vpop.f32.mrf.mxu0
        %1031 = vdwg.mxu0
        %1032 = vmatpush.bf16.msra.mxu0 %v921
        %1033 = vmatpush.bf16.msra.mxu0 %v920
        %1034 = vmatpush.bf16.msra.mxu0 %v919
        %1035 = vmatpush.bf16.msra.mxu0 %v918
        %1036 = vmatpush.bf16.msra.mxu0 %v917
        %1037 = vmatpush.bf16.msra.mxu0 %v916
        %1038 = vmatpush.bf16.msra.mxu0 %v915
        %1039 = vmatpush.bf16.msra.mxu0 %v914
        %1040 = vmatmul.bf16.gmra.mxu0 %v596
        %v1041 = vpop.f32.mrf.mxu0
        %v1042 = vadd.f32 %v1029, %v1041
        %v1043 = vpop.f32.mrf.mxu0
        %1044 = vdwg.mxu0
        %1045 = vmatpush.bf16.msra.mxu0 %v929
        %1046 = vmatpush.bf16.msra.mxu0 %v928
        %1047 = vmatpush.bf16.msra.mxu0 %v927
        %1048 = vmatpush.bf16.msra.mxu0 %v926
        %1049 = vmatpush.bf16.msra.mxu0 %v925
        %1050 = vmatpush.bf16.msra.mxu0 %v924
        %1051 = vmatpush.bf16.msra.mxu0 %v923
        %1052 = vmatpush.bf16.msra.mxu0 %v922
        %1053 = vmatmul.bf16.gmra.mxu0 %v575
        %v1054 = vpop.f32.mrf.mxu0
        %v1055 = vadd.f32 %v1042, %v1054
        %v1056 = vpop.f32.mrf.mxu0
        %1057 = vdwg.mxu0
        %1058 = vmatpush.bf16.msra.mxu0 %v937
        %1059 = vmatpush.bf16.msra.mxu0 %v936
        %1060 = vmatpush.bf16.msra.mxu0 %v935
        %1061 = vmatpush.bf16.msra.mxu0 %v934
        %1062 = vmatpush.bf16.msra.mxu0 %v933
        %1063 = vmatpush.bf16.msra.mxu0 %v932
        %1064 = vmatpush.bf16.msra.mxu0 %v931
        %1065 = vmatpush.bf16.msra.mxu0 %v930
        %1066 = vmatmul.bf16.gmra.mxu0 %v601
        %v1067 = vpop.f32.mrf.mxu0
        %v1068 = vadd.f32 %v1055, %v1067
        %v1069 = vpop.f32.mrf.mxu0
        %1070 = vdwg.mxu0
        %1071 = vmatpush.bf16.msra.mxu0 %v945
        %1072 = vmatpush.bf16.msra.mxu0 %v944
        %1073 = vmatpush.bf16.msra.mxu0 %v943
        %1074 = vmatpush.bf16.msra.mxu0 %v942
        %1075 = vmatpush.bf16.msra.mxu0 %v941
        %1076 = vmatpush.bf16.msra.mxu0 %v940
        %1077 = vmatpush.bf16.msra.mxu0 %v939
        %1078 = vmatpush.bf16.msra.mxu0 %v938
        %1079 = vmatmul.bf16.gmra.mxu0 %v591
        %v1080 = vpop.f32.mrf.mxu0
        %v1081 = vadd.f32 %v1068, %v1080
        %v1082 = vpop.f32.mrf.mxu0
        %1083 = vdwg.mxu0
        %1084 = vmatpush.bf16.msra.mxu0 0
        %1085 = vmatpush.bf16.msra.mxu0 0
        %1086 = vmatpush.bf16.msra.mxu0 0
        %1087 = vmatpush.bf16.msra.mxu0 0
        %1088 = vmatpush.bf16.msra.mxu0 0
        %1089 = vmatpush.bf16.msra.mxu0 0
        %1090 = vmatpush.bf16.msra.mxu0 0
        %1091 = vmatpush.bf16.msra.mxu0 %v1004
        %1092 = vmatmul.bf16.gmra.mxu0 %v997
        %v1093 = vpop.f32.mrf.mxu0
        %v1094 = vadd.f32 %v1081, %v1093
        %v1095 = vpop.f32.mrf.mxu0
        %1096 = vdwg.mxu0
        %v1097 = vmax.f32 %v1094, 0.0
        %v1098 = vld [vmem:[#allocation7] sm:$0xf]
        %v1099 = vld [vmem:[#allocation7 + $0x4] sm:$0xf]
        %v1100 = vld [vmem:[#allocation7 + $0x8] sm:$0xf]
        %v1101 = vld [vmem:[#allocation7 + $0xc] sm:$0xf]
        %v1102 = vld [vmem:[#allocation7 + $0x10] sm:$0xf]
        %v1103 = vld [vmem:[#allocation7 + $0x14] sm:$0xf]
        %v1104 = vld [vmem:[#allocation7 + $0x18] sm:$0xf]
        %v1105 = vld [vmem:[#allocation7 + $0x1c] sm:$0xf]
        %v1106 = vld [vmem:[#allocation7 + $0x20] sm:$0xf]
        %v1107 = vld [vmem:[#allocation7 + $0x24] sm:$0xf]
        %v1108 = vld [vmem:[#allocation7 + $0x28] sm:$0xf]
        %v1109 = vld [vmem:[#allocation7 + $0x2c] sm:$0xf]
        %v1110 = vld [vmem:[%s4] sm:$0x1]
        %v1111 = vpack.c.bf16 %v1097, %v1097
        %v1113 = vunpack.c.l.b16 %v1111
        %v1114 = vpack.c.b16 %v1113, %v1113
        %v1116 = vshrl.u32 %v1114, 16
        %v1118 = vrot.slane %v1116, 7
        %v1119 = vshll.u32 %v1114, 16
        %v1121 = vor.u32 %v1118, %v1119
        %v1123 = vsel %vm537, 0, %v1121
        %v1124 = vsel %vm543, %v1123, 0
        %v1126 = vshrl.u32 %v1124, 16
        %v1128 = vshll.u32 %v1124, 16
        %v1130 = vrot.slane %v1128, 1
        %v1131 = vor.u32 %v1126, %v1130
        %1132 = vrot.lane.b32.xlu0 %v1131, 32
        %v1133 = vpop.permute.xlu0 %1132
        %v1135 = vrot.slane %v1124, 1
        %1136 = vrot.lane.b32.xlu0 %v1135, 64
        %v1137 = vpop.permute.xlu0 %1136
        %vm1138 = vcmask 261120
        %v1140 = vsel %vm1138, %v1124, %v1133
        %vm1141 = vcmask 523264
        %v1143 = vsel %vm1141, %v1140, %v1137
        %v1145 = vperm.slane %v1110, 0
        %v1159 = vunpack.c.l.b16 %v1098
        %v1160 = vunpack.c.l.b16 %v1099
        %v1161 = vunpack.c.l.b16 %v1100
        %v1162 = vunpack.c.l.b16 %v1101
        %v1163 = vunpack.c.l.b16 %v1102
        %v1164 = vunpack.c.l.b16 %v1103
        %v1165 = vunpack.c.l.b16 %v1104
        %v1166 = vunpack.c.l.b16 %v1105
        %v1167 = vunpack.c.l.b16 %v1106
        %v1168 = vunpack.c.l.b16 %v1107
        %v1169 = vunpack.c.l.b16 %v1108
        %v1170 = vunpack.c.l.b16 %v1109
        %v1171 = vpack.c.b16 %v1160, %v1159
        %v1172 = vpack.c.b16 %v1162, %v1161
        %v1173 = vpack.c.b16 %v1164, %v1163
        %v1174 = vpack.c.b16 %v1166, %v1165
        %v1175 = vpack.c.b16 %v1168, %v1167
        %v1176 = vpack.c.b16 %v1170, %v1169
        %vm1183 = vcmask 785408
        %v1184 = vsel %vm1183, %v1143, 0
        %1186 = vmatpush.bf16.msra.mxu0 0
        %1187 = vmatpush.bf16.msra.mxu0 0
        %1188 = vmatpush.bf16.msra.mxu0 %v1176
        %1189 = vmatpush.bf16.msra.mxu0 %v1175
        %1190 = vmatpush.bf16.msra.mxu0 %v1174
        %1191 = vmatpush.bf16.msra.mxu0 %v1173
        %1192 = vmatpush.bf16.msra.mxu0 %v1172
        %1193 = vmatpush.bf16.msra.mxu0 %v1171
        %1194 = vmatmul.bf16.gmra.mxu0 %v1184
        %v1195 = vpop.f32.mrf.mxu0
        %v1196 = vadd.f32 %v1145, %v1195
        %v1197 = vpop.f32.mrf.mxu0
        %1198 = vdwg.mxu0
        %v1199 = vmax.f32 %v1196, 0.0
        %v1200 = vld [vmem:[#allocation8] sm:$0xf]
        %v1201 = vld [vmem:[#allocation8 + $0x4] sm:$0xf]
        %v1202 = vld [vmem:[#allocation8 + $0x8] sm:$0xf]
        %v1203 = vld [vmem:[#allocation8 + $0xc] sm:$0xf]
        %v1204 = vld [vmem:[#allocation8 + $0x10] sm:$0xf]
        %v1205 = vld [vmem:[#allocation8 + $0x14] sm:$0xf]
        %v1206 = vld [vmem:[#allocation8 + $0x18] sm:$0xf]
        %v1207 = vld [vmem:[#allocation8 + $0x1c] sm:$0xf]
        %v1208 = vld [vmem:[#allocation8 + $0x20] sm:$0xf]
        %v1209 = vld [vmem:[#allocation8 + $0x24] sm:$0xf]
        %v1210 = vld [vmem:[#allocation8 + $0x28] sm:$0xf]
        %v1211 = vld [vmem:[#allocation8 + $0x2c] sm:$0xf]
        %v1212 = vld [vmem:[#allocation10] sm:$0x1]
        %v1213 = vpack.c.bf16 %v1199, %v1199
        %v1215 = vunpack.c.l.b16 %v1213
        %v1216 = vpack.c.b16 %v1215, %v1215
        %v1218 = vshrl.u32 %v1216, 16
        %v1220 = vrot.slane %v1218, 7
        %v1221 = vshll.u32 %v1216, 16
        %v1223 = vor.u32 %v1220, %v1221
        %v1225 = vsel %vm537, 0, %v1223
        %v1226 = vsel %vm543, %v1225, 0
        %v1228 = vshrl.u32 %v1226, 16
        %v1230 = vshll.u32 %v1226, 16
        %v1232 = vrot.slane %v1230, 1
        %v1233 = vor.u32 %v1228, %v1232
        %1234 = vrot.lane.b32.xlu0 %v1233, 32
        %v1235 = vpop.permute.xlu0 %1234
        %v1237 = vrot.slane %v1226, 1
        %1238 = vrot.lane.b32.xlu0 %v1237, 64
        %v1239 = vpop.permute.xlu0 %1238
        %v1241 = vsel %vm1138, %v1226, %v1235
        %v1243 = vsel %vm1141, %v1241, %v1239
        %v1245 = vperm.slane %v1212, 0
        %v1259 = vunpack.c.l.b16 %v1200
        %v1260 = vunpack.c.l.b16 %v1201
        %v1261 = vunpack.c.l.b16 %v1202
        %v1262 = vunpack.c.l.b16 %v1203
        %v1263 = vunpack.c.l.b16 %v1204
        %v1264 = vunpack.c.l.b16 %v1205
        %v1265 = vunpack.c.l.b16 %v1206
        %v1266 = vunpack.c.l.b16 %v1207
        %v1267 = vunpack.c.l.b16 %v1208
        %v1268 = vunpack.c.l.b16 %v1209
        %v1269 = vunpack.c.l.b16 %v1210
        %v1270 = vunpack.c.l.b16 %v1211
        %v1271 = vpack.c.b16 %v1260, %v1259
        %v1272 = vpack.c.b16 %v1262, %v1261
        %v1273 = vpack.c.b16 %v1264, %v1263
        %v1274 = vpack.c.b16 %v1266, %v1265
        %v1275 = vpack.c.b16 %v1268, %v1267
        %v1276 = vpack.c.b16 %v1270, %v1269
        %v1283 = vsel %vm1183, %v1243, 0
        %1285 = vmatpush.bf16.msra.mxu0 0
        %1286 = vmatpush.bf16.msra.mxu0 0
        %1287 = vmatpush.bf16.msra.mxu0 %v1276
        %1288 = vmatpush.bf16.msra.mxu0 %v1275
        %1289 = vmatpush.bf16.msra.mxu0 %v1274
        %1290 = vmatpush.bf16.msra.mxu0 %v1273
        %1291 = vmatpush.bf16.msra.mxu0 %v1272
        %1292 = vmatpush.bf16.msra.mxu0 %v1271
        %1293 = vmatmul.bf16.gmra.mxu0 %v1283
        %v1294 = vpop.f32.mrf.mxu0
        %v1295 = vadd.f32 %v1245, %v1294
        %v1296 = vpop.f32.mrf.mxu0
        %1297 = vdwg.mxu0
        %v1298 = vadd.f32 %v1295, %v1097
        %v1299 = vmax.f32 %v1298, 0.0
        %s1300 = scalar_lea.vmem [#allocation7], 48
        %v1301 = vld [vmem:[%s1300] sm:$0xf]
        %v1302 = vld [vmem:[%s1300 + $0x4] sm:$0xf]
        %v1303 = vld [vmem:[%s1300 + $0x8] sm:$0xf]
        %v1304 = vld [vmem:[%s1300 + $0xc] sm:$0xf]
        %v1305 = vld [vmem:[%s1300 + $0x10] sm:$0xf]
        %v1306 = vld [vmem:[%s1300 + $0x14] sm:$0xf]
        %v1307 = vld [vmem:[%s1300 + $0x18] sm:$0xf]
        %v1308 = vld [vmem:[%s1300 + $0x1c] sm:$0xf]
        %v1309 = vld [vmem:[%s1300 + $0x20] sm:$0xf]
        %v1310 = vld [vmem:[%s1300 + $0x24] sm:$0xf]
        %v1311 = vld [vmem:[%s1300 + $0x28] sm:$0xf]
        %v1312 = vld [vmem:[%s1300 + $0x2c] sm:$0xf]
        %s1313 = scalar_lea.vmem %s4, 1
        %v1314 = vld [vmem:[%s1313] sm:$0x1]
        %v1315 = vpack.c.bf16 %v1299, %v1299
        %v1317 = vunpack.c.l.b16 %v1315
        %v1318 = vpack.c.b16 %v1317, %v1317
        %v1320 = vshrl.u32 %v1318, 16
        %v1322 = vrot.slane %v1320, 7
        %v1323 = vshll.u32 %v1318, 16
        %v1325 = vor.u32 %v1322, %v1323
        %v1327 = vsel %vm537, 0, %v1325
        %v1328 = vsel %vm543, %v1327, 0
        %v1330 = vshrl.u32 %v1328, 16
        %v1332 = vshll.u32 %v1328, 16
        %v1334 = vrot.slane %v1332, 1
        %v1335 = vor.u32 %v1330, %v1334
        %1336 = vrot.lane.b32.xlu0 %v1335, 32
        %v1337 = vpop.permute.xlu0 %1336
        %v1339 = vrot.slane %v1328, 1
        %1340 = vrot.lane.b32.xlu0 %v1339, 64
        %v1341 = vpop.permute.xlu0 %1340
        %v1343 = vsel %vm1138, %v1328, %v1337
        %v1345 = vsel %vm1141, %v1343, %v1341
        %v1347 = vperm.slane %v1314, 0
        %v1361 = vunpack.c.l.b16 %v1301
        %v1362 = vunpack.c.l.b16 %v1302
        %v1363 = vunpack.c.l.b16 %v1303
        %v1364 = vunpack.c.l.b16 %v1304
        %v1365 = vunpack.c.l.b16 %v1305
        %v1366 = vunpack.c.l.b16 %v1306
        %v1367 = vunpack.c.l.b16 %v1307
        %v1368 = vunpack.c.l.b16 %v1308
        %v1369 = vunpack.c.l.b16 %v1309
        %v1370 = vunpack.c.l.b16 %v1310
        %v1371 = vunpack.c.l.b16 %v1311
        %v1372 = vunpack.c.l.b16 %v1312
        %v1373 = vpack.c.b16 %v1362, %v1361
        %v1374 = vpack.c.b16 %v1364, %v1363
        %v1375 = vpack.c.b16 %v1366, %v1365
        %v1376 = vpack.c.b16 %v1368, %v1367
        %v1377 = vpack.c.b16 %v1370, %v1369
        %v1378 = vpack.c.b16 %v1372, %v1371
        %v1385 = vsel %vm1183, %v1345, 0
        %1387 = vmatpush.bf16.msra.mxu0 0
        %1388 = vmatpush.bf16.msra.mxu0 0
        %1389 = vmatpush.bf16.msra.mxu0 %v1378
        %1390 = vmatpush.bf16.msra.mxu0 %v1377
        %1391 = vmatpush.bf16.msra.mxu0 %v1376
        %1392 = vmatpush.bf16.msra.mxu0 %v1375
        %1393 = vmatpush.bf16.msra.mxu0 %v1374
        %1394 = vmatpush.bf16.msra.mxu0 %v1373
        %1395 = vmatmul.bf16.gmra.mxu0 %v1385
        %v1396 = vpop.f32.mrf.mxu0
        %v1397 = vadd.f32 %v1347, %v1396
        %v1398 = vpop.f32.mrf.mxu0
        %1399 = vdwg.mxu0
        %v1400 = vmax.f32 %v1397, 0.0
        %s1401 = scalar_lea.vmem [#allocation8], 48
        %v1402 = vld [vmem:[%s1401] sm:$0xf]
        %v1403 = vld [vmem:[%s1401 + $0x4] sm:$0xf]
        %v1404 = vld [vmem:[%s1401 + $0x8] sm:$0xf]
        %v1405 = vld [vmem:[%s1401 + $0xc] sm:$0xf]
        %v1406 = vld [vmem:[%s1401 + $0x10] sm:$0xf]
        %v1407 = vld [vmem:[%s1401 + $0x14] sm:$0xf]
        %v1408 = vld [vmem:[%s1401 + $0x18] sm:$0xf]
        %v1409 = vld [vmem:[%s1401 + $0x1c] sm:$0xf]
        %v1410 = vld [vmem:[%s1401 + $0x20] sm:$0xf]
        %v1411 = vld [vmem:[%s1401 + $0x24] sm:$0xf]
        %v1412 = vld [vmem:[%s1401 + $0x28] sm:$0xf]
        %v1413 = vld [vmem:[%s1401 + $0x2c] sm:$0xf]
        %s1414 = scalar_lea.vmem [#allocation10], 1
        %v1415 = vld [vmem:[%s1414] sm:$0x1]
        %v1416 = vpack.c.bf16 %v1400, %v1400
        %v1418 = vunpack.c.l.b16 %v1416
        %v1419 = vpack.c.b16 %v1418, %v1418
        %v1421 = vshrl.u32 %v1419, 16
        %v1423 = vrot.slane %v1421, 7
        %v1424 = vshll.u32 %v1419, 16
        %v1426 = vor.u32 %v1423, %v1424
        %v1428 = vsel %vm537, 0, %v1426
        %v1429 = vsel %vm543, %v1428, 0
        %v1431 = vshrl.u32 %v1429, 16
        %v1433 = vshll.u32 %v1429, 16
        %v1435 = vrot.slane %v1433, 1
        %v1436 = vor.u32 %v1431, %v1435
        %1437 = vrot.lane.b32.xlu0 %v1436, 32
        %v1438 = vpop.permute.xlu0 %1437
        %v1440 = vrot.slane %v1429, 1
        %1441 = vrot.lane.b32.xlu0 %v1440, 64
        %v1442 = vpop.permute.xlu0 %1441
        %v1444 = vsel %vm1138, %v1429, %v1438
        %v1446 = vsel %vm1141, %v1444, %v1442
        %v1448 = vperm.slane %v1415, 0
        %v1462 = vunpack.c.l.b16 %v1402
        %v1463 = vunpack.c.l.b16 %v1403
        %v1464 = vunpack.c.l.b16 %v1404
        %v1465 = vunpack.c.l.b16 %v1405
        %v1466 = vunpack.c.l.b16 %v1406
        %v1467 = vunpack.c.l.b16 %v1407
        %v1468 = vunpack.c.l.b16 %v1408
        %v1469 = vunpack.c.l.b16 %v1409
        %v1470 = vunpack.c.l.b16 %v1410
        %v1471 = vunpack.c.l.b16 %v1411
        %v1472 = vunpack.c.l.b16 %v1412
        %v1473 = vunpack.c.l.b16 %v1413
        %v1474 = vpack.c.b16 %v1463, %v1462
        %v1475 = vpack.c.b16 %v1465, %v1464
        %v1476 = vpack.c.b16 %v1467, %v1466
        %v1477 = vpack.c.b16 %v1469, %v1468
        %v1478 = vpack.c.b16 %v1471, %v1470
        %v1479 = vpack.c.b16 %v1473, %v1472
        %v1486 = vsel %vm1183, %v1446, 0
        %1488 = vmatpush.bf16.msra.mxu0 0
        %1489 = vmatpush.bf16.msra.mxu0 0
        %1490 = vmatpush.bf16.msra.mxu0 %v1479
        %1491 = vmatpush.bf16.msra.mxu0 %v1478
        %1492 = vmatpush.bf16.msra.mxu0 %v1477
        %1493 = vmatpush.bf16.msra.mxu0 %v1476
        %1494 = vmatpush.bf16.msra.mxu0 %v1475
        %1495 = vmatpush.bf16.msra.mxu0 %v1474
        %1496 = vmatmul.bf16.gmra.mxu0 %v1486
        %v1497 = vpop.f32.mrf.mxu0
        %v1498 = vadd.f32 %v1448, %v1497
        %v1499 = vpop.f32.mrf.mxu0
        %1500 = vdwg.mxu0
        %v1501 = vadd.f32 %v1498, %v1299
        %v1502 = vmax.f32 %v1501, 0.0
        %vm1503 = vcmp.ne.s32.totalorder %v480, 256
        %v1504 = vsel %vm1503, 1, 0
        %v1505 = vcvt.s32.f32 %v1504
        %v1506 = vperm.slane %v1505, 0
        %v1507 = vlaneseq
        %v1508 = vshrl.u32 %v1507, 7
        %1510 = vset.pattern.permute.xlu0 %v1508
        %1511 = vperm.xlu0 %1510, %v1506
        %v1512 = vpop.permute.xlu0 %1511
        %v1513 = vmul.f32 %v1502, %v1512
        %v1514 = vsel %vm1138, %v1513, 0.0
        %v1515 = vrot.slane %v1514, 4
        %v1516 = vadd.f32 %v1514, %v1515
        %v1517 = vrot.slane %v1516, 2
        %v1518 = vadd.f32 %v1516, %v1517
        %v1519 = vrot.slane %v1518, 1
        %v1520 = vadd.f32 %v1518, %v1519
        %v1521 = vrot.slane %v1512, 4
        %v1522 = vadd.f32 %v1512, %v1521
        %v1523 = vrot.slane %v1522, 2
        %v1524 = vadd.f32 %v1522, %v1523
        %v1525 = vrot.slane %v1524, 1
        %v1526 = vadd.f32 %v1524, %v1525
        %v1527 = vmax.f32 %v1526, 1.0
        %v1528 = vrcp.pop %v1527
        %v1529 = vmul.f32 %v1527, %v1528
        %v1530 = vsub.f32 1.0, %v1529
        %v1531 = vmul.f32 %v1528, %v1530
        %v1532 = vadd.f32 %v1528, %v1531
        %vm1533 = vweird.f32 %v1527
        %vm1534 = vweird.f32 %v1528
        %vm1535 = vmor %vm1533, %vm1534
        %v1536 = vsel %vm1535, %v1528, %v1532
        %v1537 = vand.u32 2147483647, %v1527
        %vm1538 = vcmp.eq.f32.partialorder %v1537, 8.507059e+37
        %v1539 = vand.u32 %v1527, 2147483648
        %v1540 = vor.u32 1.1754944e-38, %v1539
        %v1541 = vsel %vm1538, %v1540, %v1536
        %v1542 = vmul.f32 %v1520, %v1541
        %v1543 = vpack.c.bf16 %v1542, %v1542
        %v1544 = vld [vmem:[#allocation11] sm:$0xf]
        %v1545 = vld [vmem:[#allocation11 + $0x4] sm:$0xf]
        %v1546 = vld [vmem:[#allocation11 + $0x8] sm:$0xf]
        %v1547 = vld [vmem:[#allocation11 + $0xc] sm:$0xf]
        %v1548 = vld [vmem:[#allocation13] sm:$0x1]
        %v1553 = vunpack.c.l.b16 %v1544
        %v1554 = vunpack.c.l.b16 %v1545
        %v1555 = vunpack.c.l.b16 %v1546
        %v1556 = vunpack.c.l.b16 %v1547
        %v1557 = vpack.c.b16 %v1554, %v1553
        %v1558 = vpack.c.b16 %v1556, %v1555
        %v1562 = vsel %vm1138, %v1543, 0
        %1564 = vmatpush.bf16.msra.mxu0 0
        %1565 = vmatpush.bf16.msra.mxu0 0
        %1566 = vmatpush.bf16.msra.mxu0 0
        %1567 = vmatpush.bf16.msra.mxu0 0
        %1568 = vmatpush.bf16.msra.mxu0 0
        %1569 = vmatpush.bf16.msra.mxu0 0
        %1570 = vmatpush.bf16.msra.mxu0 %v1558
        %1571 = vmatpush.bf16.msra.mxu0 %v1557
        %1572 = vmatmul.bf16.gmra.mxu0 %v1562
        %v1573 = vpop.f32.mrf.mxu0
        %v1574 = vadd.f32 %v1548, %v1573
        %v1575 = vpop.f32.mrf.mxu0
        %1576 = vdwg.mxu0
        %vm1577 = vcmask 253952
        %1578 = vst.msk [vmem:[%s478] sm:$0x1] %vm1577, %v1542
        %vm1579 = vcmask 122880
        %1580 = vst.msk [vmem:[%s472] sm:$0x1] %vm1579, %v1574
        %s1581 = sand.u32 %s236, 1
        %s1582 = scalar_lea.sflag [#allocation4], %s1581
        %s1583 = sand.u32 %s236, 1
        %s1584 = scalar_lea.vmem [#allocation14], %s1583
        %s1585 = sand.u32 %s262, 1
        %s1586 = scalar_lea.sflag [#allocation16], %s1585
        %s1587 = sand.u32 %s262, 1
        %s1588 = scalar_lea.vmem [#allocation15], %s1587
        // Predicated region
        $region85: #{embedding_to_resnet1d_masking.1} parent=55 // pred_check
          %p1589 = pneg %p246
        $region86: #{embedding_to_resnet1d_masking.1} parent=55 // pred_check_branch
          %1591 = sbr.rel (%p1589) target = $region88
        $region87: #{embedding_to_resnet1d_masking.1} parent=55 // pred_region
          %1593 = vsyncadd %s1582, 0
          %s1594 = scalar_lea.hbm %s9, %s34
          %s1596 = sshll.u32 %s1584, 4
          %s1597 = int_to_ptr.vmem [resolvable:$true] %s1596
          %s1598 = sshll.u32 %s1594, 4
          %s1599 = int_to_ptr.hbm [resolvable:$true] %s1598
          %1601 = dma.vmem_to_hbm [thread:$0]  %s1597, 16, %s1599, %s1582
        $region88: #{embedding_to_resnet1d_masking.1} parent=55 // pred_fallthru
          _
        // Predicated region
        $region89: #{embedding_to_resnet1d_masking.1} parent=55 // pred_check
          %p1602 = pneg %p272
        $region90: #{embedding_to_resnet1d_masking.1} parent=55 // pred_check_branch
          %1604 = sbr.rel (%p1602) target = $region92
        $region91: #{embedding_to_resnet1d_masking.1} parent=55 // pred_region
          %1606 = vsyncadd %s1586, 0
          %s1607 = scalar_lea.hbm %s10, %s34
          %s1609 = sshll.u32 %s1588, 4
          %s1610 = int_to_ptr.vmem [resolvable:$true] %s1609
          %s1611 = sshll.u32 %s1607, 4
          %s1612 = int_to_ptr.hbm [resolvable:$true] %s1611
          %1614 = dma.vmem_to_hbm [thread:$0]  %s1610, 16, %s1612, %s1586
        $region92: #{embedding_to_resnet1d_masking.1} parent=55 // pred_fallthru
          _
      $region56: #{embedding_to_resnet1d_masking.1} parent=5 // pred_fallthru
        _
      %p1615 = scmp.le.s32.totalorder 2, %s29
      // Predicated region
      $region93: #{embedding_to_resnet1d_masking.1} parent=5 // pred_check
        %p1616 = pneg %p1615
      $region94: #{embedding_to_resnet1d_masking.1} parent=5 // pred_check_branch
        %1618 = sbr.rel (%p1616) target = $region96
      $region95: #{embedding_to_resnet1d_masking.1} parent=5 // pred_region
        %s1619 = ssub.s32 %s29, 2
        // Predicated region
        $region97: #{embedding_to_resnet1d_masking.1} parent=95 // pred_check
          %p1620 = pneg %p252
        $region98: #{embedding_to_resnet1d_masking.1} parent=95 // pred_check_branch
          %1622 = sbr.rel (%p1620) target = $region100
        $region99: #{embedding_to_resnet1d_masking.1} parent=95 // pred_region
          %s1623 = sand.u32 %s237, 1
          %s1624 = scalar_lea.sflag [#allocation4], %s1623
          %s1625 = sand.u32 %s237, 1
          %s1626 = scalar_lea.vmem [#allocation14], %s1625
          %1628 = dma.done %s1624, 16
        $region100: #{embedding_to_resnet1d_masking.1} parent=95 // pred_fallthru
          _
        // Predicated region
        $region101: #{embedding_to_resnet1d_masking.1} parent=95 // pred_check
          %p1629 = pneg %p278
        $region102: #{embedding_to_resnet1d_masking.1} parent=95 // pred_check_branch
          %1631 = sbr.rel (%p1629) target = $region104
        $region103: #{embedding_to_resnet1d_masking.1} parent=95 // pred_region
          %s1632 = sand.u32 %s263, 1
          %s1633 = scalar_lea.sflag [#allocation16], %s1632
          %s1634 = sand.u32 %s263, 1
          %s1635 = scalar_lea.vmem [#allocation15], %s1634
          %1637 = dma.done %s1633, 16
        $region104: #{embedding_to_resnet1d_masking.1} parent=95 // pred_fallthru
          _
      $region96: #{embedding_to_resnet1d_masking.1} parent=5 // pred_fallthru
        _
    $region6: #{embedding_to_resnet1d_masking.1} parent=1 // loop_footer
      %s33 = sadd.s32 1, %s29
    $region7: #{embedding_to_resnet1d_masking.1} parent=1 // loop_footer_branch
      %28 = sbr.rel target = $region3
    $region8: #{embedding_to_resnet1d_masking.1} parent=1 // loop_exit
      _
    %1638 = vsyncpa [#allocation3], 1
    %s1639 = scalar_lea.sflag [#allocation3], 1
    %1640 = vsyncpa %s1639, 1
    %1641 = vsyncpa [#allocation6], 1
    %1642 = vsyncpa [#allocation9], 1
    %1643 = vsyncpa [#allocation12], 1
    %1644 = vsyncpa [#allocation4], 1
    %s1645 = scalar_lea.sflag [#allocation4], 1
    %1646 = vsyncpa %s1645, 1
    %1647 = vsyncpa [#allocation16], 1
    %s1648 = scalar_lea.sflag [#allocation16], 1
    %1649 = vsyncpa %s1648, 1

</llo_original>
